<compile_context>
chip_gen: v7x
topology: tpu7x:2x2x1
jax: 0.10.0
libtpu: 0.0.40
codegen_flags: <defaults>
</compile_context>

<pallas_src>
import jax
import jax.numpy as jnp
from jax.experimental import pallas as pl
from jax.experimental.pallas import tpu as pltpu


def _residual_linear_kernel(x_ref, w_ref, b_ref, o_ref):
    # x_ref: (TM, H)  w_ref: (H, H)  b_ref: (1, H)  o_ref: (TM, H)
    x = x_ref[...]
    y = jnp.dot(x, w_ref[...], preferred_element_type=jnp.float32)   # MXU, f32 acc
    y = y + b_ref[...].astype(jnp.float32)
    # Fused residual add (the ResidualAdd semantics), in f32, then cast to out dtype.
    o_ref[...] = (y + x.astype(jnp.float32)).astype(o_ref.dtype)


def _round_up(v, m):
    return (v + m - 1) // m * m


def residual_add_linear(x, w, b, *, tm=512, vmem_budget_bytes=32 * 1024 * 1024):
    """out = (x @ w + b) + x.   x: (B, S, H), w: (H, H), b: (H,)."""
    B, S, H = x.shape
    T = B * S
    x2 = x.reshape(T, H)      # collapse of contiguous dims: no extra HBM copy
    b2 = b.reshape(1, H)

    x_item = jnp.dtype(x.dtype).itemsize
    w_bytes = H * H * jnp.dtype(w.dtype).itemsize
    b_bytes = H * jnp.dtype(b.dtype).itemsize

    # bf16 packs (16, 128) per vreg -> round the token tile to a multiple of 16.
    tm = max(16, _round_up(min(tm, T), 16))

    # Fit double-buffered x/out tiles + resident (single-buffered) W + bias into
    # the VMEM budget; shrink tm if needed (keeps v7x's tighter VMEM happy).
    def vmem_needed(tile):
        return 2 * (2 * tile * H * x_item) + w_bytes + b_bytes

    while tm > 256 and vmem_needed(tm) > vmem_budget_bytes:
        tm = max(256, _round_up(tm // 2, 16))
    # TODO(synk): for very large H where resident W alone exceeds the budget,
    # add an output-column grid axis so W streams as (H, tn) blocks.

    # Ragged last block handled by Pallas -> no pad / trim HBM round-trips.
    num_tiles = pl.cdiv(T, tm)

    bytes_accessed = 2 * T * H * x_item + w_bytes + b_bytes   # x read + out write + W + b
    vmem_limit = int(min(max(2 * vmem_needed(tm) + (4 << 20), 16 << 20), 64 << 20))

    def make_call(single_buffer_weights):
        wb_kwargs = (
            dict(pipeline_mode=pl.Buffered(1)) if single_buffer_weights else {}
        )
        return pl.pallas_call(
            _residual_linear_kernel,
            out_shape=jax.ShapeDtypeStruct((T, H), x.dtype),
            grid=(num_tiles,),
            in_specs=[
                pl.BlockSpec((tm, H), lambda i: (i, 0)),               # x, pipelined
                pl.BlockSpec((H, H), lambda i: (0, 0), **wb_kwargs),   # W, VMEM-resident
                pl.BlockSpec((1, H), lambda i: (0, 0), **wb_kwargs),   # bias, resident
            ],
            out_specs=pl.BlockSpec((tm, H), lambda i: (i, 0)),
            compiler_params=pltpu.CompilerParams(
                dimension_semantics=("parallel",),     # megacore sharding on v7x
                vmem_limit_bytes=vmem_limit,
            ),
            cost_estimate=pl.CostEstimate(
                flops=2 * T * H * H,
                transcendentals=0,
                bytes_accessed=bytes_accessed,
            ),
        )

    try:
        out2 = make_call(True)(x2, w, b2)
    except Exception:
        # Fallback for jax builds without per-BlockSpec pipeline_mode support.
        out2 = make_call(False)(x2, w, b2)

    return out2.reshape(B, S, H)


if __name__ == "__main__":
    key = jax.random.PRNGKey(0)
    k_x, k_w, k_b = jax.random.split(key, 3)

    # Small ViT-like shapes: T = 400 tokens, H = 128.
    B, S, H = 2, 200, 128
    dtype = jnp.bfloat16  # bf16 storage: kernel is HBM-bandwidth bound

    x = jax.random.normal(k_x, (B, S, H), dtype=jnp.float32).astype(dtype)
    w = (jax.random.normal(k_w, (H, H), dtype=jnp.float32)
         * (1.0 / jnp.sqrt(H))).astype(dtype)
    b = (jax.random.normal(k_b, (H,), dtype=jnp.float32) * 0.02).astype(dtype)

    # Default tm=512 clamps to the 400-token problem -> a single grid step,
    # which is the right call for ~256 KiB of total HBM traffic.
    out = residual_add_linear(x, w, b)
    out = jax.block_until_ready(out)

    # Reference: fn(x) + x with fn = Linear, computed in f32 on the bf16 inputs.
    xf, wf, bf = x.astype(jnp.float32), w.astype(jnp.float32), b.astype(jnp.float32)
    ref = jnp.einsum("bsh,hk->bsk", xf, wf) + bf + xf

    assert out.shape == x.shape
    assert out.dtype == dtype
    assert jnp.allclose(out.astype(jnp.float32), ref, atol=2e-2, rtol=2e-2)

    print("KERNEL_OK")
</pallas_src>

<mosaic_0001>
module attributes {stable_mosaic.version = 11 : i64} {
  func.func @_residual_linear_kernel(%arg0: i32, %arg1: memref<400x128xbf16, #tpu.memory_space<vmem>>, %arg2: memref<128x128xbf16, #tpu.memory_space<vmem>>, %arg3: memref<1x128xbf16, #tpu.memory_space<vmem>>, %arg4: memref<400x128xbf16, #tpu.memory_space<vmem>>) attributes {dimension_semantics = [#tpu.dimension_semantics<parallel>], iteration_bounds = array<i64: 1>, scalar_prefetch = 0 : i64, scratch_operands = 0 : i64, tpu.core_type = #tpu.core_type<tc>, window_params = [{transform_indices = @transform_0, window_bounds = array<i64: 400, 128>}, {pipeline_mode = #tpu.pipeline_mode<synchronous>, transform_indices = @transform_1, window_bounds = array<i64: 128, 128>}, {pipeline_mode = #tpu.pipeline_mode<synchronous>, transform_indices = @transform_2, window_bounds = array<i64: 1, 128>}, {transform_indices = @transform_3, window_bounds = array<i64: 400, 128>}]} {
    %c0 = arith.constant 0 : index
    %c0_0 = arith.constant 0 : index
    %0 = vector.load %arg1[%c0, %c0_0] : memref<400x128xbf16, #tpu.memory_space<vmem>>, vector<400x128xbf16>
    %c0_1 = arith.constant 0 : index
    %c0_2 = arith.constant 0 : index
    %1 = vector.load %arg2[%c0_1, %c0_2] : memref<128x128xbf16, #tpu.memory_space<vmem>>, vector<128x128xbf16>
    %cst = arith.constant dense<0.000000e+00> : vector<400x128xf32>
    %2 = tpu.matmul %0, %1, %cst {dimension_numbers = #tpu.dot_dimension_numbers<[1], [0], [0], [1], [0, 0, 1, 1], [], []>} : vector<400x128xbf16>, vector<128x128xbf16>, vector<400x128xf32> -> vector<400x128xf32>
    %c0_3 = arith.constant 0 : index
    %c0_4 = arith.constant 0 : index
    %3 = vector.load %arg3[%c0_3, %c0_4] : memref<1x128xbf16, #tpu.memory_space<vmem>>, vector<1x128xbf16>
    %4 = arith.extf %3 : vector<1x128xbf16> to vector<1x128xf32>
    %5 = vector.broadcast %4 : vector<1x128xf32> to vector<400x128xf32>
    %6 = arith.addf %2, %5 : vector<400x128xf32>
    %7 = arith.extf %0 : vector<400x128xbf16> to vector<400x128xf32>
    %8 = arith.addf %6, %7 : vector<400x128xf32>
    %9 = arith.truncf %8 : vector<400x128xf32> to vector<400x128xbf16>
    %c0_5 = arith.constant 0 : index
    %c0_6 = arith.constant 0 : index
    %10 = vector.load %arg4[%c0_5, %c0_6] : memref<400x128xbf16, #tpu.memory_space<vmem>>, vector<400x128xbf16>
    tpu.vector_store %arg4[%c0_5, %c0_6], %9 {strides = array<i32>} : memref<400x128xbf16, #tpu.memory_space<vmem>>, vector<400x128xbf16>,
    return
  }
  func.func @transform_0(%arg0: i32) -> (i32, i32) {
    %c0_i32 = arith.constant 0 : i32
    %c0_i32_0 = arith.constant 0 : i32
    return %arg0, %c0_i32 : i32, i32
  }
  func.func @transform_1(%arg0: i32) -> (i32, i32) {
    %c0_i32 = arith.constant 0 : i32
    %c0_i32_0 = arith.constant 0 : i32
    %c0_i32_1 = arith.constant 0 : i32
    return %c0_i32, %c0_i32_0 : i32, i32
  }
  func.func @transform_2(%arg0: i32) -> (i32, i32) {
    %c0_i32 = arith.constant 0 : i32
    %c0_i32_0 = arith.constant 0 : i32
    %c0_i32_1 = arith.constant 0 : i32
    return %c0_i32, %c0_i32_0 : i32, i32
  }
  func.func @transform_3(%arg0: i32) -> (i32, i32) {
    %c0_i32 = arith.constant 0 : i32
    %c0_i32_0 = arith.constant 0 : i32
    return %arg0, %c0_i32 : i32, i32
  }
}

module attributes {stable_mosaic.version = 11 : i64} {
  func.func @_residual_linear_kernel(%arg0: i32, %arg1: memref<400x128xbf16, #tpu.memory_space<vmem>>, %arg2: memref<128x128xbf16, #tpu.memory_space<vmem>>, %arg3: memref<1x128xbf16, #tpu.memory_space<vmem>>, %arg4: memref<400x128xbf16, #tpu.memory_space<vmem>>) attributes {dimension_semantics = [#tpu.dimension_semantics<parallel>], iteration_bounds = array<i64: 1>, scalar_prefetch = 0 : i64, scratch_operands = 0 : i64, tpu.core_type = #tpu.core_type<tc>, window_params = [{transform_indices = @transform_0, window_bounds = array<i64: 400, 128>}, {pipeline_mode = #tpu.pipeline_mode<synchronous>, transform_indices = @transform_1, window_bounds = array<i64: 128, 128>}, {pipeline_mode = #tpu.pipeline_mode<synchronous>, transform_indices = @transform_2, window_bounds = array<i64: 1, 128>}, {transform_indices = @transform_3, window_bounds = array<i64: 400, 128>}]} {
    %c0 = arith.constant 0 : index
    %c0_0 = arith.constant 0 : index
    %0 = vector.load %arg1[%c0, %c0_0] : memref<400x128xbf16, #tpu.memory_space<vmem>>, vector<400x128xbf16>
    %c0_1 = arith.constant 0 : index
    %c0_2 = arith.constant 0 : index
    %1 = vector.load %arg2[%c0_1, %c0_2] : memref<128x128xbf16, #tpu.memory_space<vmem>>, vector<128x128xbf16>
    %cst = arith.constant dense<0.000000e+00> : vector<400x128xf32>
    %2 = tpu.matmul %0, %1, %cst {dimension_numbers = #tpu.dot_dimension_numbers<[1], [0], [0], [1], [0, 0, 1, 1], [], []>} : vector<400x128xbf16>, vector<128x128xbf16>, vector<400x128xf32> -> vector<400x128xf32>
    %c0_3 = arith.constant 0 : index
    %c0_4 = arith.constant 0 : index
    %3 = vector.load %arg3[%c0_3, %c0_4] : memref<1x128xbf16, #tpu.memory_space<vmem>>, vector<1x128xbf16>
    %4 = arith.extf %3 : vector<1x128xbf16> to vector<1x128xf32>
    %5 = vector.broadcast %4 : vector<1x128xf32> to vector<400x128xf32>
    %6 = arith.addf %2, %5 : vector<400x128xf32>
    %7 = arith.extf %0 : vector<400x128xbf16> to vector<400x128xf32>
    %8 = arith.addf %6, %7 : vector<400x128xf32>
    %9 = arith.truncf %8 : vector<400x128xf32> to vector<400x128xbf16>
    %c0_5 = arith.constant 0 : index
    %c0_6 = arith.constant 0 : index
    %10 = vector.load %arg4[%c0_5, %c0_6] : memref<400x128xbf16, #tpu.memory_space<vmem>>, vector<400x128xbf16>
    tpu.vector_store %arg4[%c0_5, %c0_6], %9 {strides = array<i32>} : memref<400x128xbf16, #tpu.memory_space<vmem>>, vector<400x128xbf16>,
    return
  }
  func.func @transform_0(%arg0: i32) -> (i32, i32) {
    %c0_i32 = arith.constant 0 : i32
    %c0_i32_0 = arith.constant 0 : i32
    return %arg0, %c0_i32 : i32, i32
  }
  func.func @transform_1(%arg0: i32) -> (i32, i32) {
    %c0_i32 = arith.constant 0 : i32
    %c0_i32_0 = arith.constant 0 : i32
    %c0_i32_1 = arith.constant 0 : i32
    return %c0_i32, %c0_i32_0 : i32, i32
  }
  func.func @transform_2(%arg0: i32) -> (i32, i32) {
    %c0_i32 = arith.constant 0 : i32
    %c0_i32_0 = arith.constant 0 : i32
    %c0_i32_1 = arith.constant 0 : i32
    return %c0_i32, %c0_i32_0 : i32, i32
  }
  func.func @transform_3(%arg0: i32) -> (i32, i32) {
    %c0_i32 = arith.constant 0 : i32
    %c0_i32_0 = arith.constant 0 : i32
    return %arg0, %c0_i32 : i32, i32
  }
}

</mosaic_0001>

<llo_original>
// kernel: tpu_custom_call.1
$region0: #{tpu_custom_call.1}
  #allocation0 [shape = 'u32[]', space=smem, size = 0x4, offset = 0x4, fixed_abs, tag = 'smem constant byte address 0x4 - core index']
  #allocation1 [shape = 'u32[144,128]{1,0:T(1,128)}', space=vmem, size = 0x12000, scoped, tag = 'internal scratch']
  %s0 = inlined_call_operand.hbm [shape: bf16[400,128], index: 0, kind: input, shape index: {}]
  %s1 = inlined_call_operand.hbm [shape: bf16[128,128], index: 1, kind: input, shape index: {}]
  %s2 = inlined_call_operand.vmem [shape: bf16[1,128], index: 2, kind: input, shape index: {}]
  %s3 = inlined_call_operand.hbm [shape: bf16[400,128], index: 3, kind: output, shape index: {}]
  %s4 = sld [smem:[#allocation0]]
  $region30: #{tpu_custom_call.1} parent=0
    _
  %s6 = ssub.s32 1, %s4
  %s7 = scalar_select 0, %s6, %s4
  $region1: #{tpu_custom_call.1} parent=0
    #allocation2 [shape = 'u8[102400]{0}', space=vmem, size = 0x19000, scoped, tag = 'input window, operand 0, single buffered']
    #allocation3 [shape = 's32[1]{0}', space=sflag, size = 0x4, scoped, tag = 'scoped memory for tpu_custom_call.1']
    #allocation4 [shape = 's32[1]{0}', space=sflag, size = 0x4, scoped, tag = 'scoped memory for tpu_custom_call.1']
    #allocation5 [shape = 'u8[32768]{0}', space=vmem, size = 0x8000, scoped, tag = 'input window, operand 1, single buffered']
    #allocation6 [shape = 's32[1]{0}', space=sflag, size = 0x4, scoped, tag = 'scoped memory for tpu_custom_call.1']
    #allocation7 [shape = 'u8[102400]{0}', space=vmem, size = 0x19000, scoped, tag = 'output window, operand 0, single buffered']
    %8 = vsyncpa [#allocation3], 0
    %9 = vsyncpa [#allocation6], 0
    %10 = vsyncpa [#allocation4], 0
    // Predicated region
    $region2: #{tpu_custom_call.1} parent=1 // pred_check
      _
    $region3: #{tpu_custom_call.1} parent=1 // pred_check_branch
      %12 = sbr.rel (0) target = $region5
    $region4: #{tpu_custom_call.1} parent=1 // pred_region
      %s14 = ssub.s32 3200, 3200
      %15 = vsyncadd [#allocation3], %s14
      %s16 = sshll.u32 [#allocation2], 4
      %s17 = int_to_ptr.vmem [resolvable:$true] %s16
      %22 = dma.hbm_to_vmem [thread:$0]  %s0, 3200, %s17, [#allocation3], 64, 64, 4
    $region5: #{tpu_custom_call.1} parent=1 // pred_fallthru
      _
    // Predicated region
    $region6: #{tpu_custom_call.1} parent=1 // pred_check
      _
    $region7: #{tpu_custom_call.1} parent=1 // pred_check_branch
      %24 = sbr.rel (0) target = $region9
    $region8: #{tpu_custom_call.1} parent=1 // pred_region
      %s26 = ssub.s32 1024, 1024
      %27 = vsyncadd [#allocation6], %s26
      %s28 = sshll.u32 [#allocation5], 4
      %s29 = int_to_ptr.vmem [resolvable:$true] %s28
      %34 = dma.hbm_to_vmem [thread:$0]  %s1, 1024, %s29, [#allocation6], 64, 64, 4
    $region9: #{tpu_custom_call.1} parent=1 // pred_fallthru
      _
    // Predicated region
    $region10: #{tpu_custom_call.1} parent=1 // pred_check
      _
    $region11: #{tpu_custom_call.1} parent=1 // pred_check_branch
      %36 = sbr.rel (0) target = $region13
    $region12: #{tpu_custom_call.1} parent=1 // pred_region
      _
    $region13: #{tpu_custom_call.1} parent=1 // pred_fallthru
      _
    // Predicated region
    $region14: #{tpu_custom_call.1} parent=1 // pred_check
      _
    $region15: #{tpu_custom_call.1} parent=1 // pred_check_branch
      %38 = sbr.rel (0) target = $region17
    $region16: #{tpu_custom_call.1} parent=1 // pred_region
      %39 = dma.done [#allocation3], 3200
    $region17: #{tpu_custom_call.1} parent=1 // pred_fallthru
      _
    // Predicated region
    $region18: #{tpu_custom_call.1} parent=1 // pred_check
      _
    $region19: #{tpu_custom_call.1} parent=1 // pred_check_branch
      %41 = sbr.rel (0) target = $region21
    $region20: #{tpu_custom_call.1} parent=1 // pred_region
      %42 = dma.done [#allocation6], 1024
    $region21: #{tpu_custom_call.1} parent=1 // pred_fallthru
      _
    %v44 = vld [vmem:[#allocation2] sm:$0xf]
    %v45 = vld [vmem:[#allocation2 + $0x4] sm:$0xf]
    %v46 = vld [vmem:[#allocation2 + $0x8] sm:$0xf]
    %v47 = vld [vmem:[#allocation2 + $0xc] sm:$0xf]
    %v48 = vld [vmem:[#allocation2 + $0x10] sm:$0xf]
    %v49 = vld [vmem:[#allocation2 + $0x14] sm:$0xf]
    %v50 = vld [vmem:[#allocation2 + $0x18] sm:$0xf]
    %v51 = vld [vmem:[#allocation2 + $0x1c] sm:$0xf]
    %v52 = vld [vmem:[#allocation2 + $0x20] sm:$0xf]
    %v53 = vld [vmem:[#allocation2 + $0x24] sm:$0xf]
    %v54 = vld [vmem:[#allocation2 + $0x28] sm:$0xf]
    %v55 = vld [vmem:[#allocation2 + $0x2c] sm:$0xf]
    %v56 = vld [vmem:[#allocation2 + $0x30] sm:$0xf]
    %v57 = vld [vmem:[#allocation2 + $0x34] sm:$0xf]
    %v58 = vld [vmem:[#allocation2 + $0x38] sm:$0xf]
    %v59 = vld [vmem:[#allocation2 + $0x3c] sm:$0xf]
    %v60 = vld [vmem:[#allocation2 + $0x40] sm:$0xf]
    %v61 = vld [vmem:[#allocation2 + $0x44] sm:$0xf]
    %v62 = vld [vmem:[#allocation2 + $0x48] sm:$0xf]
    %v63 = vld [vmem:[#allocation2 + $0x4c] sm:$0xf]
    %v64 = vld [vmem:[#allocation2 + $0x50] sm:$0xf]
    %v65 = vld [vmem:[#allocation2 + $0x54] sm:$0xf]
    %v66 = vld [vmem:[#allocation2 + $0x58] sm:$0xf]
    %v67 = vld [vmem:[#allocation2 + $0x5c] sm:$0xf]
    %v68 = vld [vmem:[#allocation2 + $0x60] sm:$0xf]
    %v69 = vld [vmem:[#allocation2 + $0x64] sm:$0xf]
    %v70 = vld [vmem:[#allocation2 + $0x68] sm:$0xf]
    %v71 = vld [vmem:[#allocation2 + $0x6c] sm:$0xf]
    %v72 = vld [vmem:[#allocation2 + $0x70] sm:$0xf]
    %v73 = vld [vmem:[#allocation2 + $0x74] sm:$0xf]
    %v74 = vld [vmem:[#allocation2 + $0x78] sm:$0xf]
    %v75 = vld [vmem:[#allocation2 + $0x7c] sm:$0xf]
    %v76 = vld [vmem:[#allocation2 + $0x80] sm:$0xf]
    %v77 = vld [vmem:[#allocation2 + $0x84] sm:$0xf]
    %v78 = vld [vmem:[#allocation2 + $0x88] sm:$0xf]
    %v79 = vld [vmem:[#allocation2 + $0x8c] sm:$0xf]
    %v80 = vld [vmem:[#allocation2 + $0x90] sm:$0xf]
    %v81 = vld [vmem:[#allocation2 + $0x94] sm:$0xf]
    %v82 = vld [vmem:[#allocation2 + $0x98] sm:$0xf]
    %v83 = vld [vmem:[#allocation2 + $0x9c] sm:$0xf]
    %v84 = vld [vmem:[#allocation2 + $0xa0] sm:$0xf]
    %v85 = vld [vmem:[#allocation2 + $0xa4] sm:$0xf]
    %v86 = vld [vmem:[#allocation2 + $0xa8] sm:$0xf]
    %v87 = vld [vmem:[#allocation2 + $0xac] sm:$0xf]
    %v88 = vld [vmem:[#allocation2 + $0xb0] sm:$0xf]
    %v89 = vld [vmem:[#allocation2 + $0xb4] sm:$0xf]
    %v90 = vld [vmem:[#allocation2 + $0xb8] sm:$0xf]
    %v91 = vld [vmem:[#allocation2 + $0xbc] sm:$0xf]
    %v92 = vld [vmem:[#allocation2 + $0xc0] sm:$0xf]
    %v93 = vld [vmem:[#allocation2 + $0xc4] sm:$0xf]
    %v94 = vld [vmem:[#allocation5] sm:$0xf]
    %v95 = vld [vmem:[#allocation5 + $0x4] sm:$0xf]
    %v96 = vld [vmem:[#allocation5 + $0x8] sm:$0xf]
    %v97 = vld [vmem:[#allocation5 + $0xc] sm:$0xf]
    %v98 = vld [vmem:[#allocation5 + $0x10] sm:$0xf]
    %v99 = vld [vmem:[#allocation5 + $0x14] sm:$0xf]
    %v100 = vld [vmem:[#allocation5 + $0x18] sm:$0xf]
    %v101 = vld [vmem:[#allocation5 + $0x1c] sm:$0xf]
    %v102 = vld [vmem:[#allocation5 + $0x20] sm:$0xf]
    %v103 = vld [vmem:[#allocation5 + $0x24] sm:$0xf]
    %v104 = vld [vmem:[#allocation5 + $0x28] sm:$0xf]
    %v105 = vld [vmem:[#allocation5 + $0x2c] sm:$0xf]
    %v106 = vld [vmem:[#allocation5 + $0x30] sm:$0xf]
    %v107 = vld [vmem:[#allocation5 + $0x34] sm:$0xf]
    %v108 = vld [vmem:[#allocation5 + $0x38] sm:$0xf]
    %v109 = vld [vmem:[#allocation5 + $0x3c] sm:$0xf]
    %v110 = vld [vmem:[%s2] sm:$0x1]
    %v111 = vunpack.c.l.bf16 %v110
    %v112 = vlaneseq
    %v113 = vshrl.u32 %v112, 7
    %v114 = vsub.s32 0, %v113
    %v115 = vrot.slane %v111, %v114
    %v166 = vunpack.c.l.b16 %v44
    %v167 = vunpack.c.l.b16 %v45
    %v168 = vunpack.c.l.b16 %v46
    %v169 = vunpack.c.l.b16 %v47
    %v170 = vunpack.c.l.b16 %v48
    %v171 = vunpack.c.l.b16 %v49
    %v172 = vunpack.c.l.b16 %v50
    %v173 = vunpack.c.l.b16 %v51
    %v174 = vunpack.c.l.b16 %v52
    %v175 = vunpack.c.l.b16 %v53
    %v176 = vunpack.c.l.b16 %v54
    %v177 = vunpack.c.l.b16 %v55
    %v178 = vunpack.c.l.b16 %v56
    %v179 = vunpack.c.l.b16 %v57
    %v180 = vunpack.c.l.b16 %v58
    %v181 = vunpack.c.l.b16 %v59
    %v182 = vunpack.c.l.b16 %v60
    %v183 = vunpack.c.l.b16 %v61
    %v184 = vunpack.c.l.b16 %v62
    %v185 = vunpack.c.l.b16 %v63
    %v186 = vunpack.c.l.b16 %v64
    %v187 = vunpack.c.l.b16 %v65
    %v188 = vunpack.c.l.b16 %v66
    %v189 = vunpack.c.l.b16 %v67
    %v190 = vunpack.c.l.b16 %v68
    %v191 = vunpack.c.l.b16 %v69
    %v192 = vunpack.c.l.b16 %v70
    %v193 = vunpack.c.l.b16 %v71
    %v194 = vunpack.c.l.b16 %v72
    %v195 = vunpack.c.l.b16 %v73
    %v196 = vunpack.c.l.b16 %v74
    %v197 = vunpack.c.l.b16 %v75
    %v198 = vunpack.c.l.b16 %v76
    %v199 = vunpack.c.l.b16 %v77
    %v200 = vunpack.c.l.b16 %v78
    %v201 = vunpack.c.l.b16 %v79
    %v202 = vunpack.c.l.b16 %v80
    %v203 = vunpack.c.l.b16 %v81
    %v204 = vunpack.c.l.b16 %v82
    %v205 = vunpack.c.l.b16 %v83
    %v206 = vunpack.c.l.b16 %v84
    %v207 = vunpack.c.l.b16 %v85
    %v208 = vunpack.c.l.b16 %v86
    %v209 = vunpack.c.l.b16 %v87
    %v210 = vunpack.c.l.b16 %v88
    %v211 = vunpack.c.l.b16 %v89
    %v212 = vunpack.c.l.b16 %v90
    %v213 = vunpack.c.l.b16 %v91
    %v214 = vunpack.c.l.b16 %v92
    %v215 = vunpack.c.l.b16 %v93
    %v216 = vpack.c.b16 %v167, %v166
    %v217 = vpack.c.b16 %v169, %v168
    %v218 = vpack.c.b16 %v171, %v170
    %v219 = vpack.c.b16 %v173, %v172
    %v220 = vpack.c.b16 %v175, %v174
    %v221 = vpack.c.b16 %v177, %v176
    %v222 = vpack.c.b16 %v179, %v178
    %v223 = vpack.c.b16 %v181, %v180
    %v224 = vpack.c.b16 %v183, %v182
    %v225 = vpack.c.b16 %v185, %v184
    %v226 = vpack.c.b16 %v187, %v186
    %v227 = vpack.c.b16 %v189, %v188
    %v228 = vpack.c.b16 %v191, %v190
    %v229 = vpack.c.b16 %v193, %v192
    %v230 = vpack.c.b16 %v195, %v194
    %v231 = vpack.c.b16 %v197, %v196
    %v232 = vpack.c.b16 %v199, %v198
    %v233 = vpack.c.b16 %v201, %v200
    %v234 = vpack.c.b16 %v203, %v202
    %v235 = vpack.c.b16 %v205, %v204
    %v236 = vpack.c.b16 %v207, %v206
    %v237 = vpack.c.b16 %v209, %v208
    %v238 = vpack.c.b16 %v211, %v210
    %v239 = vpack.c.b16 %v213, %v212
    %v240 = vpack.c.b16 %v215, %v214
    %v282 = vunpack.c.l.b16 %v94
    %v283 = vunpack.c.l.b16 %v95
    %v284 = vunpack.c.l.b16 %v96
    %v285 = vunpack.c.l.b16 %v97
    %v286 = vunpack.c.l.b16 %v98
    %v287 = vunpack.c.l.b16 %v99
    %v288 = vunpack.c.l.b16 %v100
    %v289 = vunpack.c.l.b16 %v101
    %v290 = vunpack.c.l.b16 %v102
    %v291 = vunpack.c.l.b16 %v103
    %v292 = vunpack.c.l.b16 %v104
    %v293 = vunpack.c.l.b16 %v105
    %v294 = vunpack.c.l.b16 %v106
    %v295 = vunpack.c.l.b16 %v107
    %v296 = vunpack.c.l.b16 %v108
    %v297 = vunpack.c.l.b16 %v109
    %v298 = vpack.c.b16 %v283, %v282
    %v299 = vpack.c.b16 %v285, %v284
    %v300 = vpack.c.b16 %v287, %v286
    %v301 = vpack.c.b16 %v289, %v288
    %v302 = vpack.c.b16 %v291, %v290
    %v303 = vpack.c.b16 %v293, %v292
    %v304 = vpack.c.b16 %v295, %v294
    %v305 = vpack.c.b16 %v297, %v296
    %314 = vmatprep.subr.bf16.mxu0 0
    %315 = vmatpush1.bf16.msra.mxu0 %v298
    %316 = vmatprep.subr.bf16.mxu0 0
    %317 = vmatpush1.bf16.msra.mxu0 %v299
    %318 = vmatprep.subr.bf16.mxu0 0
    %319 = vmatpush1.bf16.msra.mxu0 %v300
    %320 = vmatprep.subr.bf16.mxu0 0
    %321 = vmatpush1.bf16.msra.mxu0 %v301
    %322 = vmatprep.subr.bf16.mxu0 0
    %323 = vmatpush1.bf16.msra.mxu0 %v302
    %324 = vmatprep.subr.bf16.mxu0 0
    %325 = vmatpush1.bf16.msra.mxu0 %v303
    %326 = vmatprep.subr.bf16.mxu0 0
    %327 = vmatpush1.bf16.msra.mxu0 %v304
    %328 = vmatprep.subr.bf16.mxu0 0
    %329 = vmatpush1.bf16.msra.mxu0 %v305
    %330 = vmatprep.subr.bf16.mxu0 0
    %331 = vmatpush1.bf16.msra.mxu0 0
    %332 = vmatprep.subr.bf16.mxu0 0
    %333 = vmatpush1.bf16.msra.mxu0 0
    %334 = vmatprep.subr.bf16.mxu0 0
    %335 = vmatpush1.bf16.msra.mxu0 0
    %336 = vmatprep.subr.bf16.mxu0 0
    %337 = vmatpush1.bf16.msra.mxu0 0
    %338 = vmatprep.subr.bf16.mxu0 0
    %339 = vmatpush1.bf16.msra.mxu0 0
    %340 = vmatprep.subr.bf16.mxu0 0
    %341 = vmatpush1.bf16.msra.mxu0 0
    %342 = vmatprep.subr.bf16.mxu0 0
    %343 = vmatpush1.bf16.msra.mxu0 0
    %344 = vmatprep.subr.bf16.mxu0 0
    %345 = vmatpush1.bf16.msra.mxu0 0
    %346 = vmatprep.mubr.bf16.mxu0 0
    %347 = vmatmul.mubr.bf16.gmra.mrb[0].mxu0 %v216
    %v348 = vpop.f32.mrb[0].mxu0
    %v349 = vadd.f32 %v115, %v348
    %v350 = vpop.f32.mrb[0].mxu0
    %v351 = vpop.f32.mrb[0].mxu0
    %v352 = vadd.f32 %v115, %v351
    %v353 = vpop.f32.mrb[0].mxu0
    %354 = vmatprep.mubr.bf16.mxu0 0
    %355 = vmatmul.mubr.bf16.gmra.mrb[0].mxu0 %v217
    %v356 = vpop.f32.mrb[0].mxu0
    %v357 = vadd.f32 %v115, %v356
    %v358 = vpop.f32.mrb[0].mxu0
    %v359 = vpop.f32.mrb[0].mxu0
    %v360 = vadd.f32 %v115, %v359
    %v361 = vpop.f32.mrb[0].mxu0
    %362 = vmatprep.mubr.bf16.mxu0 0
    %363 = vmatmul.mubr.bf16.gmra.mrb[0].mxu0 %v218
    %v364 = vpop.f32.mrb[0].mxu0
    %v365 = vadd.f32 %v115, %v364
    %v366 = vpop.f32.mrb[0].mxu0
    %v367 = vpop.f32.mrb[0].mxu0
    %v368 = vadd.f32 %v115, %v367
    %v369 = vpop.f32.mrb[0].mxu0
    %370 = vmatprep.mubr.bf16.mxu0 0
    %371 = vmatmul.mubr.bf16.gmra.mrb[0].mxu0 %v219
    %v372 = vpop.f32.mrb[0].mxu0
    %v373 = vadd.f32 %v115, %v372
    %v374 = vpop.f32.mrb[0].mxu0
    %v375 = vpop.f32.mrb[0].mxu0
    %v376 = vadd.f32 %v115, %v375
    %v377 = vpop.f32.mrb[0].mxu0
    %378 = vmatprep.mubr.bf16.mxu0 0
    %379 = vmatmul.mubr.bf16.gmra.mrb[0].mxu0 %v220
    %v380 = vpop.f32.mrb[0].mxu0
    %v381 = vadd.f32 %v115, %v380
    %v382 = vpop.f32.mrb[0].mxu0
    %v383 = vpop.f32.mrb[0].mxu0
    %v384 = vadd.f32 %v115, %v383
    %v385 = vpop.f32.mrb[0].mxu0
    %386 = vmatprep.mubr.bf16.mxu0 0
    %387 = vmatmul.mubr.bf16.gmra.mrb[0].mxu0 %v221
    %v388 = vpop.f32.mrb[0].mxu0
    %v389 = vadd.f32 %v115, %v388
    %v390 = vpop.f32.mrb[0].mxu0
    %v391 = vpop.f32.mrb[0].mxu0
    %v392 = vadd.f32 %v115, %v391
    %v393 = vpop.f32.mrb[0].mxu0
    %394 = vmatprep.mubr.bf16.mxu0 0
    %395 = vmatmul.mubr.bf16.gmra.mrb[0].mxu0 %v222
    %v396 = vpop.f32.mrb[0].mxu0
    %v397 = vadd.f32 %v115, %v396
    %v398 = vpop.f32.mrb[0].mxu0
    %v399 = vpop.f32.mrb[0].mxu0
    %v400 = vadd.f32 %v115, %v399
    %v401 = vpop.f32.mrb[0].mxu0
    %402 = vmatprep.mubr.bf16.mxu0 0
    %403 = vmatmul.mubr.bf16.gmra.mrb[0].mxu0 %v223
    %v404 = vpop.f32.mrb[0].mxu0
    %v405 = vadd.f32 %v115, %v404
    %v406 = vpop.f32.mrb[0].mxu0
    %v407 = vpop.f32.mrb[0].mxu0
    %v408 = vadd.f32 %v115, %v407
    %v409 = vpop.f32.mrb[0].mxu0
    %410 = vmatprep.mubr.bf16.mxu0 0
    %411 = vmatmul.mubr.bf16.gmra.mrb[0].mxu0 %v224
    %v412 = vpop.f32.mrb[0].mxu0
    %v413 = vadd.f32 %v115, %v412
    %v414 = vpop.f32.mrb[0].mxu0
    %v415 = vpop.f32.mrb[0].mxu0
    %v416 = vadd.f32 %v115, %v415
    %v417 = vpop.f32.mrb[0].mxu0
    %418 = vmatprep.mubr.bf16.mxu0 0
    %419 = vmatmul.mubr.bf16.gmra.mrb[0].mxu0 %v225
    %v420 = vpop.f32.mrb[0].mxu0
    %v421 = vadd.f32 %v115, %v420
    %v422 = vpop.f32.mrb[0].mxu0
    %v423 = vpop.f32.mrb[0].mxu0
    %v424 = vadd.f32 %v115, %v423
    %v425 = vpop.f32.mrb[0].mxu0
    %426 = vmatprep.mubr.bf16.mxu0 0
    %427 = vmatmul.mubr.bf16.gmra.mrb[0].mxu0 %v226
    %v428 = vpop.f32.mrb[0].mxu0
    %v429 = vadd.f32 %v115, %v428
    %v430 = vpop.f32.mrb[0].mxu0
    %v431 = vpop.f32.mrb[0].mxu0
    %v432 = vadd.f32 %v115, %v431
    %v433 = vpop.f32.mrb[0].mxu0
    %434 = vmatprep.mubr.bf16.mxu0 0
    %435 = vmatmul.mubr.bf16.gmra.mrb[0].mxu0 %v227
    %v436 = vpop.f32.mrb[0].mxu0
    %v437 = vadd.f32 %v115, %v436
    %v438 = vpop.f32.mrb[0].mxu0
    %v439 = vpop.f32.mrb[0].mxu0
    %v440 = vadd.f32 %v115, %v439
    %v441 = vpop.f32.mrb[0].mxu0
    %442 = vmatprep.mubr.bf16.mxu0 0
    %443 = vmatmul.mubr.bf16.gmra.mrb[0].mxu0 %v228
    %v444 = vpop.f32.mrb[0].mxu0
    %v445 = vadd.f32 %v115, %v444
    %v446 = vpop.f32.mrb[0].mxu0
    %v447 = vpop.f32.mrb[0].mxu0
    %v448 = vadd.f32 %v115, %v447
    %v449 = vpop.f32.mrb[0].mxu0
    %450 = vmatprep.mubr.bf16.mxu0 0
    %451 = vmatmul.mubr.bf16.gmra.mrb[0].mxu0 %v229
    %v452 = vpop.f32.mrb[0].mxu0
    %v453 = vadd.f32 %v115, %v452
    %v454 = vpop.f32.mrb[0].mxu0
    %v455 = vpop.f32.mrb[0].mxu0
    %v456 = vadd.f32 %v115, %v455
    %v457 = vpop.f32.mrb[0].mxu0
    %458 = vmatprep.mubr.bf16.mxu0 0
    %459 = vmatmul.mubr.bf16.gmra.mrb[0].mxu0 %v230
    %v460 = vpop.f32.mrb[0].mxu0
    %v461 = vadd.f32 %v115, %v460
    %v462 = vpop.f32.mrb[0].mxu0
    %v463 = vpop.f32.mrb[0].mxu0
    %v464 = vadd.f32 %v115, %v463
    %v465 = vpop.f32.mrb[0].mxu0
    %466 = vmatprep.mubr.bf16.mxu0 0
    %467 = vmatmul.mubr.bf16.gmra.mrb[0].mxu0 %v231
    %v468 = vpop.f32.mrb[0].mxu0
    %v469 = vadd.f32 %v115, %v468
    %v470 = vpop.f32.mrb[0].mxu0
    %v471 = vpop.f32.mrb[0].mxu0
    %v472 = vadd.f32 %v115, %v471
    %v473 = vpop.f32.mrb[0].mxu0
    %474 = vmatprep.mubr.bf16.mxu0 0
    %475 = vmatmul.mubr.bf16.gmra.mrb[0].mxu0 %v232
    %v476 = vpop.f32.mrb[0].mxu0
    %v477 = vadd.f32 %v115, %v476
    %v478 = vpop.f32.mrb[0].mxu0
    %v479 = vpop.f32.mrb[0].mxu0
    %v480 = vadd.f32 %v115, %v479
    %v481 = vpop.f32.mrb[0].mxu0
    %482 = vmatprep.mubr.bf16.mxu0 0
    %483 = vmatmul.mubr.bf16.gmra.mrb[0].mxu0 %v233
    %v484 = vpop.f32.mrb[0].mxu0
    %v485 = vadd.f32 %v115, %v484
    %v486 = vpop.f32.mrb[0].mxu0
    %v487 = vpop.f32.mrb[0].mxu0
    %v488 = vadd.f32 %v115, %v487
    %v489 = vpop.f32.mrb[0].mxu0
    %490 = vmatprep.mubr.bf16.mxu0 0
    %491 = vmatmul.mubr.bf16.gmra.mrb[0].mxu0 %v234
    %v492 = vpop.f32.mrb[0].mxu0
    %v493 = vadd.f32 %v115, %v492
    %v494 = vpop.f32.mrb[0].mxu0
    %v495 = vpop.f32.mrb[0].mxu0
    %v496 = vadd.f32 %v115, %v495
    %v497 = vpop.f32.mrb[0].mxu0
    %498 = vmatprep.mubr.bf16.mxu0 0
    %499 = vmatmul.mubr.bf16.gmra.mrb[0].mxu0 %v235
    %v500 = vpop.f32.mrb[0].mxu0
    %v501 = vadd.f32 %v115, %v500
    %v502 = vpop.f32.mrb[0].mxu0
    %v503 = vpop.f32.mrb[0].mxu0
    %v504 = vadd.f32 %v115, %v503
    %v505 = vpop.f32.mrb[0].mxu0
    %506 = vmatprep.mubr.bf16.mxu0 0
    %507 = vmatmul.mubr.bf16.gmra.mrb[0].mxu0 %v236
    %v508 = vpop.f32.mrb[0].mxu0
    %v509 = vadd.f32 %v115, %v508
    %v510 = vpop.f32.mrb[0].mxu0
    %v511 = vpop.f32.mrb[0].mxu0
    %v512 = vadd.f32 %v115, %v511
    %v513 = vpop.f32.mrb[0].mxu0
    %514 = vmatprep.mubr.bf16.mxu0 0
    %515 = vmatmul.mubr.bf16.gmra.mrb[0].mxu0 %v237
    %v516 = vpop.f32.mrb[0].mxu0
    %v517 = vadd.f32 %v115, %v516
    %v518 = vpop.f32.mrb[0].mxu0
    %v519 = vpop.f32.mrb[0].mxu0
    %v520 = vadd.f32 %v115, %v519
    %v521 = vpop.f32.mrb[0].mxu0
    %522 = vmatprep.mubr.bf16.mxu0 0
    %523 = vmatmul.mubr.bf16.gmra.mrb[0].mxu0 %v238
    %v524 = vpop.f32.mrb[0].mxu0
    %v525 = vadd.f32 %v115, %v524
    %v526 = vpop.f32.mrb[0].mxu0
    %v527 = vpop.f32.mrb[0].mxu0
    %v528 = vadd.f32 %v115, %v527
    %v529 = vpop.f32.mrb[0].mxu0
    %530 = vmatprep.mubr.bf16.mxu0 0
    %531 = vmatmul.mubr.bf16.gmra.mrb[0].mxu0 %v239
    %v532 = vpop.f32.mrb[0].mxu0
    %v533 = vadd.f32 %v115, %v532
    %v534 = vpop.f32.mrb[0].mxu0
    %v535 = vpop.f32.mrb[0].mxu0
    %v536 = vadd.f32 %v115, %v535
    %v537 = vpop.f32.mrb[0].mxu0
    %538 = vmatprep.mubr.bf16.mxu0 0
    %539 = vmatmul.mubr.bf16.gmra.mrb[0].mxu0 %v240
    %v540 = vpop.f32.mrb[0].mxu0
    %v541 = vadd.f32 %v115, %v540
    %v542 = vpop.f32.mrb[0].mxu0
    %v543 = vpop.f32.mrb[0].mxu0
    %v544 = vadd.f32 %v115, %v543
    %v545 = vpop.f32.mrb[0].mxu0
    %546 = vdwg.mxu0
    %v547 = vunpack.c.l.bf16 %v44
    %v548 = vunpack.c.l.bf16 %v45
    %v549 = vunpack.c.l.bf16 %v46
    %v550 = vunpack.c.l.bf16 %v47
    %v551 = vunpack.c.l.bf16 %v48
    %v552 = vunpack.c.l.bf16 %v49
    %v553 = vunpack.c.l.bf16 %v50
    %v554 = vunpack.c.l.bf16 %v51
    %v555 = vunpack.c.l.bf16 %v52
    %v556 = vunpack.c.l.bf16 %v53
    %v557 = vunpack.c.l.bf16 %v54
    %v558 = vunpack.c.l.bf16 %v55
    %v559 = vunpack.c.l.bf16 %v56
    %v560 = vunpack.c.l.bf16 %v57
    %v561 = vunpack.c.l.bf16 %v58
    %v562 = vunpack.c.l.bf16 %v59
    %v563 = vunpack.c.l.bf16 %v60
    %v564 = vunpack.c.l.bf16 %v61
    %v565 = vunpack.c.l.bf16 %v62
    %v566 = vunpack.c.l.bf16 %v63
    %v567 = vunpack.c.l.bf16 %v64
    %v568 = vunpack.c.l.bf16 %v65
    %v569 = vunpack.c.l.bf16 %v66
    %v570 = vunpack.c.l.bf16 %v67
    %v571 = vunpack.c.l.bf16 %v68
    %v572 = vunpack.c.l.bf16 %v69
    %v573 = vunpack.c.l.bf16 %v70
    %v574 = vunpack.c.l.bf16 %v71
    %v575 = vunpack.c.l.bf16 %v72
    %v576 = vunpack.c.l.bf16 %v73
    %v577 = vunpack.c.l.bf16 %v74
    %v578 = vunpack.c.l.bf16 %v75
    %v579 = vunpack.c.l.bf16 %v76
    %v580 = vunpack.c.l.bf16 %v77
    %v581 = vunpack.c.l.bf16 %v78
    %v582 = vunpack.c.l.bf16 %v79
    %v583 = vunpack.c.l.bf16 %v80
    %v584 = vunpack.c.l.bf16 %v81
    %v585 = vunpack.c.l.bf16 %v82
    %v586 = vunpack.c.l.bf16 %v83
    %v587 = vunpack.c.l.bf16 %v84
    %v588 = vunpack.c.l.bf16 %v85
    %v589 = vunpack.c.l.bf16 %v86
    %v590 = vunpack.c.l.bf16 %v87
    %v591 = vunpack.c.l.bf16 %v88
    %v592 = vunpack.c.l.bf16 %v89
    %v593 = vunpack.c.l.bf16 %v90
    %v594 = vunpack.c.l.bf16 %v91
    %v595 = vunpack.c.l.bf16 %v92
    %v596 = vunpack.c.l.bf16 %v93
    %v597 = vadd.f32 %v349, %v547
    %v598 = vadd.f32 %v352, %v548
    %v599 = vadd.f32 %v357, %v549
    %v600 = vadd.f32 %v360, %v550
    %v601 = vadd.f32 %v365, %v551
    %v602 = vadd.f32 %v368, %v552
    %v603 = vadd.f32 %v373, %v553
    %v604 = vadd.f32 %v376, %v554
    %v605 = vadd.f32 %v381, %v555
    %v606 = vadd.f32 %v384, %v556
    %v607 = vadd.f32 %v389, %v557
    %v608 = vadd.f32 %v392, %v558
    %v609 = vadd.f32 %v397, %v559
    %v610 = vadd.f32 %v400, %v560
    %v611 = vadd.f32 %v405, %v561
    %v612 = vadd.f32 %v408, %v562
    %v613 = vadd.f32 %v413, %v563
    %v614 = vadd.f32 %v416, %v564
    %v615 = vadd.f32 %v421, %v565
    %v616 = vadd.f32 %v424, %v566
    %v617 = vadd.f32 %v429, %v567
    %v618 = vadd.f32 %v432, %v568
    %v619 = vadd.f32 %v437, %v569
    %v620 = vadd.f32 %v440, %v570
    %v621 = vadd.f32 %v445, %v571
    %v622 = vadd.f32 %v448, %v572
    %v623 = vadd.f32 %v453, %v573
    %v624 = vadd.f32 %v456, %v574
    %v625 = vadd.f32 %v461, %v575
    %v626 = vadd.f32 %v464, %v576
    %v627 = vadd.f32 %v469, %v577
    %v628 = vadd.f32 %v472, %v578
    %v629 = vadd.f32 %v477, %v579
    %v630 = vadd.f32 %v480, %v580
    %v631 = vadd.f32 %v485, %v581
    %v632 = vadd.f32 %v488, %v582
    %v633 = vadd.f32 %v493, %v583
    %v634 = vadd.f32 %v496, %v584
    %v635 = vadd.f32 %v501, %v585
    %v636 = vadd.f32 %v504, %v586
    %v637 = vadd.f32 %v509, %v587
    %v638 = vadd.f32 %v512, %v588
    %v639 = vadd.f32 %v517, %v589
    %v640 = vadd.f32 %v520, %v590
    %v641 = vadd.f32 %v525, %v591
    %v642 = vadd.f32 %v528, %v592
    %v643 = vadd.f32 %v533, %v593
    %v644 = vadd.f32 %v536, %v594
    %v645 = vadd.f32 %v541, %v595
    %v646 = vadd.f32 %v544, %v596
    %v647 = vpack.c.bf16 %v598, %v597
    %v648 = vpack.c.bf16 %v600, %v599
    %v649 = vpack.c.bf16 %v602, %v601
    %v650 = vpack.c.bf16 %v604, %v603
    %v651 = vpack.c.bf16 %v606, %v605
    %v652 = vpack.c.bf16 %v608, %v607
    %v653 = vpack.c.bf16 %v610, %v609
    %v654 = vpack.c.bf16 %v612, %v611
    %v655 = vpack.c.bf16 %v614, %v613
    %v656 = vpack.c.bf16 %v616, %v615
    %v657 = vpack.c.bf16 %v618, %v617
    %v658 = vpack.c.bf16 %v620, %v619
    %v659 = vpack.c.bf16 %v622, %v621
    %v660 = vpack.c.bf16 %v624, %v623
    %v661 = vpack.c.bf16 %v626, %v625
    %v662 = vpack.c.bf16 %v628, %v627
    %v663 = vpack.c.bf16 %v630, %v629
    %v664 = vpack.c.bf16 %v632, %v631
    %v665 = vpack.c.bf16 %v634, %v633
    %v666 = vpack.c.bf16 %v636, %v635
    %v667 = vpack.c.bf16 %v638, %v637
    %v668 = vpack.c.bf16 %v640, %v639
    %v669 = vpack.c.bf16 %v642, %v641
    %v670 = vpack.c.bf16 %v644, %v643
    %v671 = vpack.c.bf16 %v646, %v645
    %v697 = vunpack.c.l.b16 %v647
    %v698 = vunpack.c.h.b16 %v647
    %v699 = vunpack.c.l.b16 %v648
    %v700 = vunpack.c.h.b16 %v648
    %v701 = vunpack.c.l.b16 %v649
    %v702 = vunpack.c.h.b16 %v649
    %v703 = vunpack.c.l.b16 %v650
    %v704 = vunpack.c.h.b16 %v650
    %v705 = vunpack.c.l.b16 %v651
    %v706 = vunpack.c.h.b16 %v651
    %v707 = vunpack.c.l.b16 %v652
    %v708 = vunpack.c.h.b16 %v652
    %v709 = vunpack.c.l.b16 %v653
    %v710 = vunpack.c.h.b16 %v653
    %v711 = vunpack.c.l.b16 %v654
    %v712 = vunpack.c.h.b16 %v654
    %v713 = vunpack.c.l.b16 %v655
    %v714 = vunpack.c.h.b16 %v655
    %v715 = vunpack.c.l.b16 %v656
    %v716 = vunpack.c.h.b16 %v656
    %v717 = vunpack.c.l.b16 %v657
    %v718 = vunpack.c.h.b16 %v657
    %v719 = vunpack.c.l.b16 %v658
    %v720 = vunpack.c.h.b16 %v658
    %v721 = vunpack.c.l.b16 %v659
    %v722 = vunpack.c.h.b16 %v659
    %v723 = vunpack.c.l.b16 %v660
    %v724 = vunpack.c.h.b16 %v660
    %v725 = vunpack.c.l.b16 %v661
    %v726 = vunpack.c.h.b16 %v661
    %v727 = vunpack.c.l.b16 %v662
    %v728 = vunpack.c.h.b16 %v662
    %v729 = vunpack.c.l.b16 %v663
    %v730 = vunpack.c.h.b16 %v663
    %v731 = vunpack.c.l.b16 %v664
    %v732 = vunpack.c.h.b16 %v664
    %v733 = vunpack.c.l.b16 %v665
    %v734 = vunpack.c.h.b16 %v665
    %v735 = vunpack.c.l.b16 %v666
    %v736 = vunpack.c.h.b16 %v666
    %v737 = vunpack.c.l.b16 %v667
    %v738 = vunpack.c.h.b16 %v667
    %v739 = vunpack.c.l.b16 %v668
    %v740 = vunpack.c.h.b16 %v668
    %v741 = vunpack.c.l.b16 %v669
    %v742 = vunpack.c.h.b16 %v669
    %v743 = vunpack.c.l.b16 %v670
    %v744 = vunpack.c.h.b16 %v670
    %v745 = vunpack.c.l.b16 %v671
    %v746 = vunpack.c.h.b16 %v671
    %v747 = vpack.c.b16 %v697, %v697
    %v748 = vpack.c.b16 %v698, %v698
    %v749 = vpack.c.b16 %v699, %v699
    %v750 = vpack.c.b16 %v700, %v700
    %v751 = vpack.c.b16 %v701, %v701
    %v752 = vpack.c.b16 %v702, %v702
    %v753 = vpack.c.b16 %v703, %v703
    %v754 = vpack.c.b16 %v704, %v704
    %v755 = vpack.c.b16 %v705, %v705
    %v756 = vpack.c.b16 %v706, %v706
    %v757 = vpack.c.b16 %v707, %v707
    %v758 = vpack.c.b16 %v708, %v708
    %v759 = vpack.c.b16 %v709, %v709
    %v760 = vpack.c.b16 %v710, %v710
    %v761 = vpack.c.b16 %v711, %v711
    %v762 = vpack.c.b16 %v712, %v712
    %v763 = vpack.c.b16 %v713, %v713
    %v764 = vpack.c.b16 %v714, %v714
    %v765 = vpack.c.b16 %v715, %v715
    %v766 = vpack.c.b16 %v716, %v716
    %v767 = vpack.c.b16 %v717, %v717
    %v768 = vpack.c.b16 %v718, %v718
    %v769 = vpack.c.b16 %v719, %v719
    %v770 = vpack.c.b16 %v720, %v720
    %v771 = vpack.c.b16 %v721, %v721
    %v772 = vpack.c.b16 %v722, %v722
    %v773 = vpack.c.b16 %v723, %v723
    %v774 = vpack.c.b16 %v724, %v724
    %v775 = vpack.c.b16 %v725, %v725
    %v776 = vpack.c.b16 %v726, %v726
    %v777 = vpack.c.b16 %v727, %v727
    %v778 = vpack.c.b16 %v728, %v728
    %v779 = vpack.c.b16 %v729, %v729
    %v780 = vpack.c.b16 %v730, %v730
    %v781 = vpack.c.b16 %v731, %v731
    %v782 = vpack.c.b16 %v732, %v732
    %v783 = vpack.c.b16 %v733, %v733
    %v784 = vpack.c.b16 %v734, %v734
    %v785 = vpack.c.b16 %v735, %v735
    %v786 = vpack.c.b16 %v736, %v736
    %v787 = vpack.c.b16 %v737, %v737
    %v788 = vpack.c.b16 %v738, %v738
    %v789 = vpack.c.b16 %v739, %v739
    %v790 = vpack.c.b16 %v740, %v740
    %v791 = vpack.c.b16 %v741, %v741
    %v792 = vpack.c.b16 %v742, %v742
    %v793 = vpack.c.b16 %v743, %v743
    %v794 = vpack.c.b16 %v744, %v744
    %v795 = vpack.c.b16 %v745, %v745
    %v796 = vpack.c.b16 %v746, %v746
    %847 = vst [vmem:[#allocation7] sm:$0xf] %v747
    %848 = vst [vmem:[#allocation7 + $0x4] sm:$0xf] %v748
    %849 = vst [vmem:[#allocation7 + $0x8] sm:$0xf] %v749
    %850 = vst [vmem:[#allocation7 + $0xc] sm:$0xf] %v750
    %851 = vst [vmem:[#allocation7 + $0x10] sm:$0xf] %v751
    %852 = vst [vmem:[#allocation7 + $0x14] sm:$0xf] %v752
    %853 = vst [vmem:[#allocation7 + $0x18] sm:$0xf] %v753
    %854 = vst [vmem:[#allocation7 + $0x1c] sm:$0xf] %v754
    %855 = vst [vmem:[#allocation7 + $0x20] sm:$0xf] %v755
    %856 = vst [vmem:[#allocation7 + $0x24] sm:$0xf] %v756
    %857 = vst [vmem:[#allocation7 + $0x28] sm:$0xf] %v757
    %858 = vst [vmem:[#allocation7 + $0x2c] sm:$0xf] %v758
    %859 = vst [vmem:[#allocation7 + $0x30] sm:$0xf] %v759
    %860 = vst [vmem:[#allocation7 + $0x34] sm:$0xf] %v760
    %861 = vst [vmem:[#allocation7 + $0x38] sm:$0xf] %v761
    %862 = vst [vmem:[#allocation7 + $0x3c] sm:$0xf] %v762
    %863 = vst [vmem:[#allocation7 + $0x40] sm:$0xf] %v763
    %864 = vst [vmem:[#allocation7 + $0x44] sm:$0xf] %v764
    %865 = vst [vmem:[#allocation7 + $0x48] sm:$0xf] %v765
    %866 = vst [vmem:[#allocation7 + $0x4c] sm:$0xf] %v766
    %867 = vst [vmem:[#allocation7 + $0x50] sm:$0xf] %v767
    %868 = vst [vmem:[#allocation7 + $0x54] sm:$0xf] %v768
    %869 = vst [vmem:[#allocation7 + $0x58] sm:$0xf] %v769
    %870 = vst [vmem:[#allocation7 + $0x5c] sm:$0xf] %v770
    %871 = vst [vmem:[#allocation7 + $0x60] sm:$0xf] %v771
    %872 = vst [vmem:[#allocation7 + $0x64] sm:$0xf] %v772
    %873 = vst [vmem:[#allocation7 + $0x68] sm:$0xf] %v773
    %874 = vst [vmem:[#allocation7 + $0x6c] sm:$0xf] %v774
    %875 = vst [vmem:[#allocation7 + $0x70] sm:$0xf] %v775
    %876 = vst [vmem:[#allocation7 + $0x74] sm:$0xf] %v776
    %877 = vst [vmem:[#allocation7 + $0x78] sm:$0xf] %v777
    %878 = vst [vmem:[#allocation7 + $0x7c] sm:$0xf] %v778
    %879 = vst [vmem:[#allocation7 + $0x80] sm:$0xf] %v779
    %880 = vst [vmem:[#allocation7 + $0x84] sm:$0xf] %v780
    %881 = vst [vmem:[#allocation7 + $0x88] sm:$0xf] %v781
    %882 = vst [vmem:[#allocation7 + $0x8c] sm:$0xf] %v782
    %883 = vst [vmem:[#allocation7 + $0x90] sm:$0xf] %v783
    %884 = vst [vmem:[#allocation7 + $0x94] sm:$0xf] %v784
    %885 = vst [vmem:[#allocation7 + $0x98] sm:$0xf] %v785
    %886 = vst [vmem:[#allocation7 + $0x9c] sm:$0xf] %v786
    %887 = vst [vmem:[#allocation7 + $0xa0] sm:$0xf] %v787
    %888 = vst [vmem:[#allocation7 + $0xa4] sm:$0xf] %v788
    %889 = vst [vmem:[#allocation7 + $0xa8] sm:$0xf] %v789
    %890 = vst [vmem:[#allocation7 + $0xac] sm:$0xf] %v790
    %891 = vst [vmem:[#allocation7 + $0xb0] sm:$0xf] %v791
    %892 = vst [vmem:[#allocation7 + $0xb4] sm:$0xf] %v792
    %893 = vst [vmem:[#allocation7 + $0xb8] sm:$0xf] %v793
    %894 = vst [vmem:[#allocation7 + $0xbc] sm:$0xf] %v794
    %895 = vst [vmem:[#allocation7 + $0xc0] sm:$0xf] %v795
    %896 = vst [vmem:[#allocation7 + $0xc4] sm:$0xf] %v796
    // Predicated region
    $region22: #{tpu_custom_call.1} parent=1 // pred_check
      _
    $region23: #{tpu_custom_call.1} parent=1 // pred_check_branch
      %898 = sbr.rel (0) target = $region25
    $region24: #{tpu_custom_call.1} parent=1 // pred_region
      %s900 = ssub.s32 3200, 3200
      %901 = vsyncadd [#allocation4], %s900
      %s902 = sshll.u32 [#allocation7], 4
      %s903 = int_to_ptr.vmem [resolvable:$true] %s902
      %908 = dma.vmem_to_hbm [thread:$0]  %s903, 3200, %s3, [#allocation4], 64, 64, 4
    $region25: #{tpu_custom_call.1} parent=1 // pred_fallthru
      _
    // Predicated region
    $region26: #{tpu_custom_call.1} parent=1 // pred_check
      _
    $region27: #{tpu_custom_call.1} parent=1 // pred_check_branch
      %910 = sbr.rel (0) target = $region29
    $region28: #{tpu_custom_call.1} parent=1 // pred_region
      %911 = dma.done [#allocation4], 3200
    $region29: #{tpu_custom_call.1} parent=1 // pred_fallthru
      _
    %912 = vsyncpa [#allocation3], 1
    %913 = vsyncpa [#allocation6], 1
    %914 = vsyncpa [#allocation4], 1

// kernel: tpu_custom_call.1
$region0: #{tpu_custom_call.1}
  #allocation0 [shape = 'u32[]', space=smem, size = 0x4, offset = 0x4, fixed_abs, tag = 'smem constant byte address 0x4 - core index']
  #allocation1 [shape = 'u32[144,128]{1,0:T(1,128)}', space=vmem, size = 0x12000, scoped, tag = 'internal scratch']
  %s0 = inlined_call_operand.hbm [shape: bf16[400,128], index: 0, kind: input, shape index: {}]
  %s1 = inlined_call_operand.hbm [shape: bf16[128,128], index: 1, kind: input, shape index: {}]
  %s2 = inlined_call_operand.vmem [shape: bf16[1,128], index: 2, kind: input, shape index: {}]
  %s3 = inlined_call_operand.hbm [shape: bf16[400,128], index: 3, kind: output, shape index: {}]
  %s4 = sld [smem:[#allocation0]]
  $region30: #{tpu_custom_call.1} parent=0
    _
  %s6 = ssub.s32 1, %s4
  %s7 = scalar_select 0, %s6, %s4
  $region1: #{tpu_custom_call.1} parent=0
    #allocation2 [shape = 'u8[102400]{0}', space=vmem, size = 0x19000, scoped, tag = 'input window, operand 0, single buffered']
    #allocation3 [shape = 's32[1]{0}', space=sflag, size = 0x4, scoped, tag = 'scoped memory for tpu_custom_call.1']
    #allocation4 [shape = 's32[1]{0}', space=sflag, size = 0x4, scoped, tag = 'scoped memory for tpu_custom_call.1']
    #allocation5 [shape = 'u8[32768]{0}', space=vmem, size = 0x8000, scoped, tag = 'input window, operand 1, single buffered']
    #allocation6 [shape = 's32[1]{0}', space=sflag, size = 0x4, scoped, tag = 'scoped memory for tpu_custom_call.1']
    #allocation7 [shape = 'u8[102400]{0}', space=vmem, size = 0x19000, scoped, tag = 'output window, operand 0, single buffered']
    %8 = vsyncpa [#allocation3], 0
    %9 = vsyncpa [#allocation6], 0
    %10 = vsyncpa [#allocation4], 0
    // Predicated region
    $region2: #{tpu_custom_call.1} parent=1 // pred_check
      _
    $region3: #{tpu_custom_call.1} parent=1 // pred_check_branch
      %12 = sbr.rel (0) target = $region5
    $region4: #{tpu_custom_call.1} parent=1 // pred_region
      %s14 = ssub.s32 3200, 3200
      %15 = vsyncadd [#allocation3], %s14
      %s16 = sshll.u32 [#allocation2], 4
      %s17 = int_to_ptr.vmem [resolvable:$true] %s16
      %22 = dma.hbm_to_vmem [thread:$0]  %s0, 3200, %s17, [#allocation3], 64, 64, 4
    $region5: #{tpu_custom_call.1} parent=1 // pred_fallthru
      _
    // Predicated region
    $region6: #{tpu_custom_call.1} parent=1 // pred_check
      _
    $region7: #{tpu_custom_call.1} parent=1 // pred_check_branch
      %24 = sbr.rel (0) target = $region9
    $region8: #{tpu_custom_call.1} parent=1 // pred_region
      %s26 = ssub.s32 1024, 1024
      %27 = vsyncadd [#allocation6], %s26
      %s28 = sshll.u32 [#allocation5], 4
      %s29 = int_to_ptr.vmem [resolvable:$true] %s28
      %34 = dma.hbm_to_vmem [thread:$0]  %s1, 1024, %s29, [#allocation6], 64, 64, 4
    $region9: #{tpu_custom_call.1} parent=1 // pred_fallthru
      _
    // Predicated region
    $region10: #{tpu_custom_call.1} parent=1 // pred_check
      _
    $region11: #{tpu_custom_call.1} parent=1 // pred_check_branch
      %36 = sbr.rel (0) target = $region13
    $region12: #{tpu_custom_call.1} parent=1 // pred_region
      _
    $region13: #{tpu_custom_call.1} parent=1 // pred_fallthru
      _
    // Predicated region
    $region14: #{tpu_custom_call.1} parent=1 // pred_check
      _
    $region15: #{tpu_custom_call.1} parent=1 // pred_check_branch
      %38 = sbr.rel (0) target = $region17
    $region16: #{tpu_custom_call.1} parent=1 // pred_region
      %39 = dma.done [#allocation3], 3200
    $region17: #{tpu_custom_call.1} parent=1 // pred_fallthru
      _
    // Predicated region
    $region18: #{tpu_custom_call.1} parent=1 // pred_check
      _
    $region19: #{tpu_custom_call.1} parent=1 // pred_check_branch
      %41 = sbr.rel (0) target = $region21
    $region20: #{tpu_custom_call.1} parent=1 // pred_region
      %42 = dma.done [#allocation6], 1024
    $region21: #{tpu_custom_call.1} parent=1 // pred_fallthru
      _
    %v44 = vld [vmem:[#allocation2] sm:$0xf]
    %v45 = vld [vmem:[#allocation2 + $0x4] sm:$0xf]
    %v46 = vld [vmem:[#allocation2 + $0x8] sm:$0xf]
    %v47 = vld [vmem:[#allocation2 + $0xc] sm:$0xf]
    %v48 = vld [vmem:[#allocation2 + $0x10] sm:$0xf]
    %v49 = vld [vmem:[#allocation2 + $0x14] sm:$0xf]
    %v50 = vld [vmem:[#allocation2 + $0x18] sm:$0xf]
    %v51 = vld [vmem:[#allocation2 + $0x1c] sm:$0xf]
    %v52 = vld [vmem:[#allocation2 + $0x20] sm:$0xf]
    %v53 = vld [vmem:[#allocation2 + $0x24] sm:$0xf]
    %v54 = vld [vmem:[#allocation2 + $0x28] sm:$0xf]
    %v55 = vld [vmem:[#allocation2 + $0x2c] sm:$0xf]
    %v56 = vld [vmem:[#allocation2 + $0x30] sm:$0xf]
    %v57 = vld [vmem:[#allocation2 + $0x34] sm:$0xf]
    %v58 = vld [vmem:[#allocation2 + $0x38] sm:$0xf]
    %v59 = vld [vmem:[#allocation2 + $0x3c] sm:$0xf]
    %v60 = vld [vmem:[#allocation2 + $0x40] sm:$0xf]
    %v61 = vld [vmem:[#allocation2 + $0x44] sm:$0xf]
    %v62 = vld [vmem:[#allocation2 + $0x48] sm:$0xf]
    %v63 = vld [vmem:[#allocation2 + $0x4c] sm:$0xf]
    %v64 = vld [vmem:[#allocation2 + $0x50] sm:$0xf]
    %v65 = vld [vmem:[#allocation2 + $0x54] sm:$0xf]
    %v66 = vld [vmem:[#allocation2 + $0x58] sm:$0xf]
    %v67 = vld [vmem:[#allocation2 + $0x5c] sm:$0xf]
    %v68 = vld [vmem:[#allocation2 + $0x60] sm:$0xf]
    %v69 = vld [vmem:[#allocation2 + $0x64] sm:$0xf]
    %v70 = vld [vmem:[#allocation2 + $0x68] sm:$0xf]
    %v71 = vld [vmem:[#allocation2 + $0x6c] sm:$0xf]
    %v72 = vld [vmem:[#allocation2 + $0x70] sm:$0xf]
    %v73 = vld [vmem:[#allocation2 + $0x74] sm:$0xf]
    %v74 = vld [vmem:[#allocation2 + $0x78] sm:$0xf]
    %v75 = vld [vmem:[#allocation2 + $0x7c] sm:$0xf]
    %v76 = vld [vmem:[#allocation2 + $0x80] sm:$0xf]
    %v77 = vld [vmem:[#allocation2 + $0x84] sm:$0xf]
    %v78 = vld [vmem:[#allocation2 + $0x88] sm:$0xf]
    %v79 = vld [vmem:[#allocation2 + $0x8c] sm:$0xf]
    %v80 = vld [vmem:[#allocation2 + $0x90] sm:$0xf]
    %v81 = vld [vmem:[#allocation2 + $0x94] sm:$0xf]
    %v82 = vld [vmem:[#allocation2 + $0x98] sm:$0xf]
    %v83 = vld [vmem:[#allocation2 + $0x9c] sm:$0xf]
    %v84 = vld [vmem:[#allocation2 + $0xa0] sm:$0xf]
    %v85 = vld [vmem:[#allocation2 + $0xa4] sm:$0xf]
    %v86 = vld [vmem:[#allocation2 + $0xa8] sm:$0xf]
    %v87 = vld [vmem:[#allocation2 + $0xac] sm:$0xf]
    %v88 = vld [vmem:[#allocation2 + $0xb0] sm:$0xf]
    %v89 = vld [vmem:[#allocation2 + $0xb4] sm:$0xf]
    %v90 = vld [vmem:[#allocation2 + $0xb8] sm:$0xf]
    %v91 = vld [vmem:[#allocation2 + $0xbc] sm:$0xf]
    %v92 = vld [vmem:[#allocation2 + $0xc0] sm:$0xf]
    %v93 = vld [vmem:[#allocation2 + $0xc4] sm:$0xf]
    %v94 = vld [vmem:[#allocation5] sm:$0xf]
    %v95 = vld [vmem:[#allocation5 + $0x4] sm:$0xf]
    %v96 = vld [vmem:[#allocation5 + $0x8] sm:$0xf]
    %v97 = vld [vmem:[#allocation5 + $0xc] sm:$0xf]
    %v98 = vld [vmem:[#allocation5 + $0x10] sm:$0xf]
    %v99 = vld [vmem:[#allocation5 + $0x14] sm:$0xf]
    %v100 = vld [vmem:[#allocation5 + $0x18] sm:$0xf]
    %v101 = vld [vmem:[#allocation5 + $0x1c] sm:$0xf]
    %v102 = vld [vmem:[#allocation5 + $0x20] sm:$0xf]
    %v103 = vld [vmem:[#allocation5 + $0x24] sm:$0xf]
    %v104 = vld [vmem:[#allocation5 + $0x28] sm:$0xf]
    %v105 = vld [vmem:[#allocation5 + $0x2c] sm:$0xf]
    %v106 = vld [vmem:[#allocation5 + $0x30] sm:$0xf]
    %v107 = vld [vmem:[#allocation5 + $0x34] sm:$0xf]
    %v108 = vld [vmem:[#allocation5 + $0x38] sm:$0xf]
    %v109 = vld [vmem:[#allocation5 + $0x3c] sm:$0xf]
    %v110 = vld [vmem:[%s2] sm:$0x1]
    %v111 = vunpack.c.l.bf16 %v110
    %v112 = vlaneseq
    %v113 = vshrl.u32 %v112, 7
    %v114 = vsub.s32 0, %v113
    %v115 = vrot.slane %v111, %v114
    %v166 = vunpack.c.l.b16 %v44
    %v167 = vunpack.c.l.b16 %v45
    %v168 = vunpack.c.l.b16 %v46
    %v169 = vunpack.c.l.b16 %v47
    %v170 = vunpack.c.l.b16 %v48
    %v171 = vunpack.c.l.b16 %v49
    %v172 = vunpack.c.l.b16 %v50
    %v173 = vunpack.c.l.b16 %v51
    %v174 = vunpack.c.l.b16 %v52
    %v175 = vunpack.c.l.b16 %v53
    %v176 = vunpack.c.l.b16 %v54
    %v177 = vunpack.c.l.b16 %v55
    %v178 = vunpack.c.l.b16 %v56
    %v179 = vunpack.c.l.b16 %v57
    %v180 = vunpack.c.l.b16 %v58
    %v181 = vunpack.c.l.b16 %v59
    %v182 = vunpack.c.l.b16 %v60
    %v183 = vunpack.c.l.b16 %v61
    %v184 = vunpack.c.l.b16 %v62
    %v185 = vunpack.c.l.b16 %v63
    %v186 = vunpack.c.l.b16 %v64
    %v187 = vunpack.c.l.b16 %v65
    %v188 = vunpack.c.l.b16 %v66
    %v189 = vunpack.c.l.b16 %v67
    %v190 = vunpack.c.l.b16 %v68
    %v191 = vunpack.c.l.b16 %v69
    %v192 = vunpack.c.l.b16 %v70
    %v193 = vunpack.c.l.b16 %v71
    %v194 = vunpack.c.l.b16 %v72
    %v195 = vunpack.c.l.b16 %v73
    %v196 = vunpack.c.l.b16 %v74
    %v197 = vunpack.c.l.b16 %v75
    %v198 = vunpack.c.l.b16 %v76
    %v199 = vunpack.c.l.b16 %v77
    %v200 = vunpack.c.l.b16 %v78
    %v201 = vunpack.c.l.b16 %v79
    %v202 = vunpack.c.l.b16 %v80
    %v203 = vunpack.c.l.b16 %v81
    %v204 = vunpack.c.l.b16 %v82
    %v205 = vunpack.c.l.b16 %v83
    %v206 = vunpack.c.l.b16 %v84
    %v207 = vunpack.c.l.b16 %v85
    %v208 = vunpack.c.l.b16 %v86
    %v209 = vunpack.c.l.b16 %v87
    %v210 = vunpack.c.l.b16 %v88
    %v211 = vunpack.c.l.b16 %v89
    %v212 = vunpack.c.l.b16 %v90
    %v213 = vunpack.c.l.b16 %v91
    %v214 = vunpack.c.l.b16 %v92
    %v215 = vunpack.c.l.b16 %v93
    %v216 = vpack.c.b16 %v167, %v166
    %v217 = vpack.c.b16 %v169, %v168
    %v218 = vpack.c.b16 %v171, %v170
    %v219 = vpack.c.b16 %v173, %v172
    %v220 = vpack.c.b16 %v175, %v174
    %v221 = vpack.c.b16 %v177, %v176
    %v222 = vpack.c.b16 %v179, %v178
    %v223 = vpack.c.b16 %v181, %v180
    %v224 = vpack.c.b16 %v183, %v182
    %v225 = vpack.c.b16 %v185, %v184
    %v226 = vpack.c.b16 %v187, %v186
    %v227 = vpack.c.b16 %v189, %v188
    %v228 = vpack.c.b16 %v191, %v190
    %v229 = vpack.c.b16 %v193, %v192
    %v230 = vpack.c.b16 %v195, %v194
    %v231 = vpack.c.b16 %v197, %v196
    %v232 = vpack.c.b16 %v199, %v198
    %v233 = vpack.c.b16 %v201, %v200
    %v234 = vpack.c.b16 %v203, %v202
    %v235 = vpack.c.b16 %v205, %v204
    %v236 = vpack.c.b16 %v207, %v206
    %v237 = vpack.c.b16 %v209, %v208
    %v238 = vpack.c.b16 %v211, %v210
    %v239 = vpack.c.b16 %v213, %v212
    %v240 = vpack.c.b16 %v215, %v214
    %v282 = vunpack.c.l.b16 %v94
    %v283 = vunpack.c.l.b16 %v95
    %v284 = vunpack.c.l.b16 %v96
    %v285 = vunpack.c.l.b16 %v97
    %v286 = vunpack.c.l.b16 %v98
    %v287 = vunpack.c.l.b16 %v99
    %v288 = vunpack.c.l.b16 %v100
    %v289 = vunpack.c.l.b16 %v101
    %v290 = vunpack.c.l.b16 %v102
    %v291 = vunpack.c.l.b16 %v103
    %v292 = vunpack.c.l.b16 %v104
    %v293 = vunpack.c.l.b16 %v105
    %v294 = vunpack.c.l.b16 %v106
    %v295 = vunpack.c.l.b16 %v107
    %v296 = vunpack.c.l.b16 %v108
    %v297 = vunpack.c.l.b16 %v109
    %v298 = vpack.c.b16 %v283, %v282
    %v299 = vpack.c.b16 %v285, %v284
    %v300 = vpack.c.b16 %v287, %v286
    %v301 = vpack.c.b16 %v289, %v288
    %v302 = vpack.c.b16 %v291, %v290
    %v303 = vpack.c.b16 %v293, %v292
    %v304 = vpack.c.b16 %v295, %v294
    %v305 = vpack.c.b16 %v297, %v296
    %314 = vmatprep.subr.bf16.mxu0 0
    %315 = vmatpush1.bf16.msra.mxu0 %v298
    %316 = vmatprep.subr.bf16.mxu0 0
    %317 = vmatpush1.bf16.msra.mxu0 %v299
    %318 = vmatprep.subr.bf16.mxu0 0
    %319 = vmatpush1.bf16.msra.mxu0 %v300
    %320 = vmatprep.subr.bf16.mxu0 0
    %321 = vmatpush1.bf16.msra.mxu0 %v301
    %322 = vmatprep.subr.bf16.mxu0 0
    %323 = vmatpush1.bf16.msra.mxu0 %v302
    %324 = vmatprep.subr.bf16.mxu0 0
    %325 = vmatpush1.bf16.msra.mxu0 %v303
    %326 = vmatprep.subr.bf16.mxu0 0
    %327 = vmatpush1.bf16.msra.mxu0 %v304
    %328 = vmatprep.subr.bf16.mxu0 0
    %329 = vmatpush1.bf16.msra.mxu0 %v305
    %330 = vmatprep.subr.bf16.mxu0 0
    %331 = vmatpush1.bf16.msra.mxu0 0
    %332 = vmatprep.subr.bf16.mxu0 0
    %333 = vmatpush1.bf16.msra.mxu0 0
    %334 = vmatprep.subr.bf16.mxu0 0
    %335 = vmatpush1.bf16.msra.mxu0 0
    %336 = vmatprep.subr.bf16.mxu0 0
    %337 = vmatpush1.bf16.msra.mxu0 0
    %338 = vmatprep.subr.bf16.mxu0 0
    %339 = vmatpush1.bf16.msra.mxu0 0
    %340 = vmatprep.subr.bf16.mxu0 0
    %341 = vmatpush1.bf16.msra.mxu0 0
    %342 = vmatprep.subr.bf16.mxu0 0
    %343 = vmatpush1.bf16.msra.mxu0 0
    %344 = vmatprep.subr.bf16.mxu0 0
    %345 = vmatpush1.bf16.msra.mxu0 0
    %346 = vmatprep.mubr.bf16.mxu0 0
    %347 = vmatmul.mubr.bf16.gmra.mrb[0].mxu0 %v216
    %v348 = vpop.f32.mrb[0].mxu0
    %v349 = vadd.f32 %v115, %v348
    %v350 = vpop.f32.mrb[0].mxu0
    %v351 = vpop.f32.mrb[0].mxu0
    %v352 = vadd.f32 %v115, %v351
    %v353 = vpop.f32.mrb[0].mxu0
    %354 = vmatprep.mubr.bf16.mxu0 0
    %355 = vmatmul.mubr.bf16.gmra.mrb[0].mxu0 %v217
    %v356 = vpop.f32.mrb[0].mxu0
    %v357 = vadd.f32 %v115, %v356
    %v358 = vpop.f32.mrb[0].mxu0
    %v359 = vpop.f32.mrb[0].mxu0
    %v360 = vadd.f32 %v115, %v359
    %v361 = vpop.f32.mrb[0].mxu0
    %362 = vmatprep.mubr.bf16.mxu0 0
    %363 = vmatmul.mubr.bf16.gmra.mrb[0].mxu0 %v218
    %v364 = vpop.f32.mrb[0].mxu0
    %v365 = vadd.f32 %v115, %v364
    %v366 = vpop.f32.mrb[0].mxu0
    %v367 = vpop.f32.mrb[0].mxu0
    %v368 = vadd.f32 %v115, %v367
    %v369 = vpop.f32.mrb[0].mxu0
    %370 = vmatprep.mubr.bf16.mxu0 0
    %371 = vmatmul.mubr.bf16.gmra.mrb[0].mxu0 %v219
    %v372 = vpop.f32.mrb[0].mxu0
    %v373 = vadd.f32 %v115, %v372
    %v374 = vpop.f32.mrb[0].mxu0
    %v375 = vpop.f32.mrb[0].mxu0
    %v376 = vadd.f32 %v115, %v375
    %v377 = vpop.f32.mrb[0].mxu0
    %378 = vmatprep.mubr.bf16.mxu0 0
    %379 = vmatmul.mubr.bf16.gmra.mrb[0].mxu0 %v220
    %v380 = vpop.f32.mrb[0].mxu0
    %v381 = vadd.f32 %v115, %v380
    %v382 = vpop.f32.mrb[0].mxu0
    %v383 = vpop.f32.mrb[0].mxu0
    %v384 = vadd.f32 %v115, %v383
    %v385 = vpop.f32.mrb[0].mxu0
    %386 = vmatprep.mubr.bf16.mxu0 0
    %387 = vmatmul.mubr.bf16.gmra.mrb[0].mxu0 %v221
    %v388 = vpop.f32.mrb[0].mxu0
    %v389 = vadd.f32 %v115, %v388
    %v390 = vpop.f32.mrb[0].mxu0
    %v391 = vpop.f32.mrb[0].mxu0
    %v392 = vadd.f32 %v115, %v391
    %v393 = vpop.f32.mrb[0].mxu0
    %394 = vmatprep.mubr.bf16.mxu0 0
    %395 = vmatmul.mubr.bf16.gmra.mrb[0].mxu0 %v222
    %v396 = vpop.f32.mrb[0].mxu0
    %v397 = vadd.f32 %v115, %v396
    %v398 = vpop.f32.mrb[0].mxu0
    %v399 = vpop.f32.mrb[0].mxu0
    %v400 = vadd.f32 %v115, %v399
    %v401 = vpop.f32.mrb[0].mxu0
    %402 = vmatprep.mubr.bf16.mxu0 0
    %403 = vmatmul.mubr.bf16.gmra.mrb[0].mxu0 %v223
    %v404 = vpop.f32.mrb[0].mxu0
    %v405 = vadd.f32 %v115, %v404
    %v406 = vpop.f32.mrb[0].mxu0
    %v407 = vpop.f32.mrb[0].mxu0
    %v408 = vadd.f32 %v115, %v407
    %v409 = vpop.f32.mrb[0].mxu0
    %410 = vmatprep.mubr.bf16.mxu0 0
    %411 = vmatmul.mubr.bf16.gmra.mrb[0].mxu0 %v224
    %v412 = vpop.f32.mrb[0].mxu0
    %v413 = vadd.f32 %v115, %v412
    %v414 = vpop.f32.mrb[0].mxu0
    %v415 = vpop.f32.mrb[0].mxu0
    %v416 = vadd.f32 %v115, %v415
    %v417 = vpop.f32.mrb[0].mxu0
    %418 = vmatprep.mubr.bf16.mxu0 0
    %419 = vmatmul.mubr.bf16.gmra.mrb[0].mxu0 %v225
    %v420 = vpop.f32.mrb[0].mxu0
    %v421 = vadd.f32 %v115, %v420
    %v422 = vpop.f32.mrb[0].mxu0
    %v423 = vpop.f32.mrb[0].mxu0
    %v424 = vadd.f32 %v115, %v423
    %v425 = vpop.f32.mrb[0].mxu0
    %426 = vmatprep.mubr.bf16.mxu0 0
    %427 = vmatmul.mubr.bf16.gmra.mrb[0].mxu0 %v226
    %v428 = vpop.f32.mrb[0].mxu0
    %v429 = vadd.f32 %v115, %v428
    %v430 = vpop.f32.mrb[0].mxu0
    %v431 = vpop.f32.mrb[0].mxu0
    %v432 = vadd.f32 %v115, %v431
    %v433 = vpop.f32.mrb[0].mxu0
    %434 = vmatprep.mubr.bf16.mxu0 0
    %435 = vmatmul.mubr.bf16.gmra.mrb[0].mxu0 %v227
    %v436 = vpop.f32.mrb[0].mxu0
    %v437 = vadd.f32 %v115, %v436
    %v438 = vpop.f32.mrb[0].mxu0
    %v439 = vpop.f32.mrb[0].mxu0
    %v440 = vadd.f32 %v115, %v439
    %v441 = vpop.f32.mrb[0].mxu0
    %442 = vmatprep.mubr.bf16.mxu0 0
    %443 = vmatmul.mubr.bf16.gmra.mrb[0].mxu0 %v228
    %v444 = vpop.f32.mrb[0].mxu0
    %v445 = vadd.f32 %v115, %v444
    %v446 = vpop.f32.mrb[0].mxu0
    %v447 = vpop.f32.mrb[0].mxu0
    %v448 = vadd.f32 %v115, %v447
    %v449 = vpop.f32.mrb[0].mxu0
    %450 = vmatprep.mubr.bf16.mxu0 0
    %451 = vmatmul.mubr.bf16.gmra.mrb[0].mxu0 %v229
    %v452 = vpop.f32.mrb[0].mxu0
    %v453 = vadd.f32 %v115, %v452
    %v454 = vpop.f32.mrb[0].mxu0
    %v455 = vpop.f32.mrb[0].mxu0
    %v456 = vadd.f32 %v115, %v455
    %v457 = vpop.f32.mrb[0].mxu0
    %458 = vmatprep.mubr.bf16.mxu0 0
    %459 = vmatmul.mubr.bf16.gmra.mrb[0].mxu0 %v230
    %v460 = vpop.f32.mrb[0].mxu0
    %v461 = vadd.f32 %v115, %v460
    %v462 = vpop.f32.mrb[0].mxu0
    %v463 = vpop.f32.mrb[0].mxu0
    %v464 = vadd.f32 %v115, %v463
    %v465 = vpop.f32.mrb[0].mxu0
    %466 = vmatprep.mubr.bf16.mxu0 0
    %467 = vmatmul.mubr.bf16.gmra.mrb[0].mxu0 %v231
    %v468 = vpop.f32.mrb[0].mxu0
    %v469 = vadd.f32 %v115, %v468
    %v470 = vpop.f32.mrb[0].mxu0
    %v471 = vpop.f32.mrb[0].mxu0
    %v472 = vadd.f32 %v115, %v471
    %v473 = vpop.f32.mrb[0].mxu0
    %474 = vmatprep.mubr.bf16.mxu0 0
    %475 = vmatmul.mubr.bf16.gmra.mrb[0].mxu0 %v232
    %v476 = vpop.f32.mrb[0].mxu0
    %v477 = vadd.f32 %v115, %v476
    %v478 = vpop.f32.mrb[0].mxu0
    %v479 = vpop.f32.mrb[0].mxu0
    %v480 = vadd.f32 %v115, %v479
    %v481 = vpop.f32.mrb[0].mxu0
    %482 = vmatprep.mubr.bf16.mxu0 0
    %483 = vmatmul.mubr.bf16.gmra.mrb[0].mxu0 %v233
    %v484 = vpop.f32.mrb[0].mxu0
    %v485 = vadd.f32 %v115, %v484
    %v486 = vpop.f32.mrb[0].mxu0
    %v487 = vpop.f32.mrb[0].mxu0
    %v488 = vadd.f32 %v115, %v487
    %v489 = vpop.f32.mrb[0].mxu0
    %490 = vmatprep.mubr.bf16.mxu0 0
    %491 = vmatmul.mubr.bf16.gmra.mrb[0].mxu0 %v234
    %v492 = vpop.f32.mrb[0].mxu0
    %v493 = vadd.f32 %v115, %v492
    %v494 = vpop.f32.mrb[0].mxu0
    %v495 = vpop.f32.mrb[0].mxu0
    %v496 = vadd.f32 %v115, %v495
    %v497 = vpop.f32.mrb[0].mxu0
    %498 = vmatprep.mubr.bf16.mxu0 0
    %499 = vmatmul.mubr.bf16.gmra.mrb[0].mxu0 %v235
    %v500 = vpop.f32.mrb[0].mxu0
    %v501 = vadd.f32 %v115, %v500
    %v502 = vpop.f32.mrb[0].mxu0
    %v503 = vpop.f32.mrb[0].mxu0
    %v504 = vadd.f32 %v115, %v503
    %v505 = vpop.f32.mrb[0].mxu0
    %506 = vmatprep.mubr.bf16.mxu0 0
    %507 = vmatmul.mubr.bf16.gmra.mrb[0].mxu0 %v236
    %v508 = vpop.f32.mrb[0].mxu0
    %v509 = vadd.f32 %v115, %v508
    %v510 = vpop.f32.mrb[0].mxu0
    %v511 = vpop.f32.mrb[0].mxu0
    %v512 = vadd.f32 %v115, %v511
    %v513 = vpop.f32.mrb[0].mxu0
    %514 = vmatprep.mubr.bf16.mxu0 0
    %515 = vmatmul.mubr.bf16.gmra.mrb[0].mxu0 %v237
    %v516 = vpop.f32.mrb[0].mxu0
    %v517 = vadd.f32 %v115, %v516
    %v518 = vpop.f32.mrb[0].mxu0
    %v519 = vpop.f32.mrb[0].mxu0
    %v520 = vadd.f32 %v115, %v519
    %v521 = vpop.f32.mrb[0].mxu0
    %522 = vmatprep.mubr.bf16.mxu0 0
    %523 = vmatmul.mubr.bf16.gmra.mrb[0].mxu0 %v238
    %v524 = vpop.f32.mrb[0].mxu0
    %v525 = vadd.f32 %v115, %v524
    %v526 = vpop.f32.mrb[0].mxu0
    %v527 = vpop.f32.mrb[0].mxu0
    %v528 = vadd.f32 %v115, %v527
    %v529 = vpop.f32.mrb[0].mxu0
    %530 = vmatprep.mubr.bf16.mxu0 0
    %531 = vmatmul.mubr.bf16.gmra.mrb[0].mxu0 %v239
    %v532 = vpop.f32.mrb[0].mxu0
    %v533 = vadd.f32 %v115, %v532
    %v534 = vpop.f32.mrb[0].mxu0
    %v535 = vpop.f32.mrb[0].mxu0
    %v536 = vadd.f32 %v115, %v535
    %v537 = vpop.f32.mrb[0].mxu0
    %538 = vmatprep.mubr.bf16.mxu0 0
    %539 = vmatmul.mubr.bf16.gmra.mrb[0].mxu0 %v240
    %v540 = vpop.f32.mrb[0].mxu0
    %v541 = vadd.f32 %v115, %v540
    %v542 = vpop.f32.mrb[0].mxu0
    %v543 = vpop.f32.mrb[0].mxu0
    %v544 = vadd.f32 %v115, %v543
    %v545 = vpop.f32.mrb[0].mxu0
    %546 = vdwg.mxu0
    %v547 = vunpack.c.l.bf16 %v44
    %v548 = vunpack.c.l.bf16 %v45
    %v549 = vunpack.c.l.bf16 %v46
    %v550 = vunpack.c.l.bf16 %v47
    %v551 = vunpack.c.l.bf16 %v48
    %v552 = vunpack.c.l.bf16 %v49
    %v553 = vunpack.c.l.bf16 %v50
    %v554 = vunpack.c.l.bf16 %v51
    %v555 = vunpack.c.l.bf16 %v52
    %v556 = vunpack.c.l.bf16 %v53
    %v557 = vunpack.c.l.bf16 %v54
    %v558 = vunpack.c.l.bf16 %v55
    %v559 = vunpack.c.l.bf16 %v56
    %v560 = vunpack.c.l.bf16 %v57
    %v561 = vunpack.c.l.bf16 %v58
    %v562 = vunpack.c.l.bf16 %v59
    %v563 = vunpack.c.l.bf16 %v60
    %v564 = vunpack.c.l.bf16 %v61
    %v565 = vunpack.c.l.bf16 %v62
    %v566 = vunpack.c.l.bf16 %v63
    %v567 = vunpack.c.l.bf16 %v64
    %v568 = vunpack.c.l.bf16 %v65
    %v569 = vunpack.c.l.bf16 %v66
    %v570 = vunpack.c.l.bf16 %v67
    %v571 = vunpack.c.l.bf16 %v68
    %v572 = vunpack.c.l.bf16 %v69
    %v573 = vunpack.c.l.bf16 %v70
    %v574 = vunpack.c.l.bf16 %v71
    %v575 = vunpack.c.l.bf16 %v72
    %v576 = vunpack.c.l.bf16 %v73
    %v577 = vunpack.c.l.bf16 %v74
    %v578 = vunpack.c.l.bf16 %v75
    %v579 = vunpack.c.l.bf16 %v76
    %v580 = vunpack.c.l.bf16 %v77
    %v581 = vunpack.c.l.bf16 %v78
    %v582 = vunpack.c.l.bf16 %v79
    %v583 = vunpack.c.l.bf16 %v80
    %v584 = vunpack.c.l.bf16 %v81
    %v585 = vunpack.c.l.bf16 %v82
    %v586 = vunpack.c.l.bf16 %v83
    %v587 = vunpack.c.l.bf16 %v84
    %v588 = vunpack.c.l.bf16 %v85
    %v589 = vunpack.c.l.bf16 %v86
    %v590 = vunpack.c.l.bf16 %v87
    %v591 = vunpack.c.l.bf16 %v88
    %v592 = vunpack.c.l.bf16 %v89
    %v593 = vunpack.c.l.bf16 %v90
    %v594 = vunpack.c.l.bf16 %v91
    %v595 = vunpack.c.l.bf16 %v92
    %v596 = vunpack.c.l.bf16 %v93
    %v597 = vadd.f32 %v349, %v547
    %v598 = vadd.f32 %v352, %v548
    %v599 = vadd.f32 %v357, %v549
    %v600 = vadd.f32 %v360, %v550
    %v601 = vadd.f32 %v365, %v551
    %v602 = vadd.f32 %v368, %v552
    %v603 = vadd.f32 %v373, %v553
    %v604 = vadd.f32 %v376, %v554
    %v605 = vadd.f32 %v381, %v555
    %v606 = vadd.f32 %v384, %v556
    %v607 = vadd.f32 %v389, %v557
    %v608 = vadd.f32 %v392, %v558
    %v609 = vadd.f32 %v397, %v559
    %v610 = vadd.f32 %v400, %v560
    %v611 = vadd.f32 %v405, %v561
    %v612 = vadd.f32 %v408, %v562
    %v613 = vadd.f32 %v413, %v563
    %v614 = vadd.f32 %v416, %v564
    %v615 = vadd.f32 %v421, %v565
    %v616 = vadd.f32 %v424, %v566
    %v617 = vadd.f32 %v429, %v567
    %v618 = vadd.f32 %v432, %v568
    %v619 = vadd.f32 %v437, %v569
    %v620 = vadd.f32 %v440, %v570
    %v621 = vadd.f32 %v445, %v571
    %v622 = vadd.f32 %v448, %v572
    %v623 = vadd.f32 %v453, %v573
    %v624 = vadd.f32 %v456, %v574
    %v625 = vadd.f32 %v461, %v575
    %v626 = vadd.f32 %v464, %v576
    %v627 = vadd.f32 %v469, %v577
    %v628 = vadd.f32 %v472, %v578
    %v629 = vadd.f32 %v477, %v579
    %v630 = vadd.f32 %v480, %v580
    %v631 = vadd.f32 %v485, %v581
    %v632 = vadd.f32 %v488, %v582
    %v633 = vadd.f32 %v493, %v583
    %v634 = vadd.f32 %v496, %v584
    %v635 = vadd.f32 %v501, %v585
    %v636 = vadd.f32 %v504, %v586
    %v637 = vadd.f32 %v509, %v587
    %v638 = vadd.f32 %v512, %v588
    %v639 = vadd.f32 %v517, %v589
    %v640 = vadd.f32 %v520, %v590
    %v641 = vadd.f32 %v525, %v591
    %v642 = vadd.f32 %v528, %v592
    %v643 = vadd.f32 %v533, %v593
    %v644 = vadd.f32 %v536, %v594
    %v645 = vadd.f32 %v541, %v595
    %v646 = vadd.f32 %v544, %v596
    %v647 = vpack.c.bf16 %v598, %v597
    %v648 = vpack.c.bf16 %v600, %v599
    %v649 = vpack.c.bf16 %v602, %v601
    %v650 = vpack.c.bf16 %v604, %v603
    %v651 = vpack.c.bf16 %v606, %v605
    %v652 = vpack.c.bf16 %v608, %v607
    %v653 = vpack.c.bf16 %v610, %v609
    %v654 = vpack.c.bf16 %v612, %v611
    %v655 = vpack.c.bf16 %v614, %v613
    %v656 = vpack.c.bf16 %v616, %v615
    %v657 = vpack.c.bf16 %v618, %v617
    %v658 = vpack.c.bf16 %v620, %v619
    %v659 = vpack.c.bf16 %v622, %v621
    %v660 = vpack.c.bf16 %v624, %v623
    %v661 = vpack.c.bf16 %v626, %v625
    %v662 = vpack.c.bf16 %v628, %v627
    %v663 = vpack.c.bf16 %v630, %v629
    %v664 = vpack.c.bf16 %v632, %v631
    %v665 = vpack.c.bf16 %v634, %v633
    %v666 = vpack.c.bf16 %v636, %v635
    %v667 = vpack.c.bf16 %v638, %v637
    %v668 = vpack.c.bf16 %v640, %v639
    %v669 = vpack.c.bf16 %v642, %v641
    %v670 = vpack.c.bf16 %v644, %v643
    %v671 = vpack.c.bf16 %v646, %v645
    %v697 = vunpack.c.l.b16 %v647
    %v698 = vunpack.c.h.b16 %v647
    %v699 = vunpack.c.l.b16 %v648
    %v700 = vunpack.c.h.b16 %v648
    %v701 = vunpack.c.l.b16 %v649
    %v702 = vunpack.c.h.b16 %v649
    %v703 = vunpack.c.l.b16 %v650
    %v704 = vunpack.c.h.b16 %v650
    %v705 = vunpack.c.l.b16 %v651
    %v706 = vunpack.c.h.b16 %v651
    %v707 = vunpack.c.l.b16 %v652
    %v708 = vunpack.c.h.b16 %v652
    %v709 = vunpack.c.l.b16 %v653
    %v710 = vunpack.c.h.b16 %v653
    %v711 = vunpack.c.l.b16 %v654
    %v712 = vunpack.c.h.b16 %v654
    %v713 = vunpack.c.l.b16 %v655
    %v714 = vunpack.c.h.b16 %v655
    %v715 = vunpack.c.l.b16 %v656
    %v716 = vunpack.c.h.b16 %v656
    %v717 = vunpack.c.l.b16 %v657
    %v718 = vunpack.c.h.b16 %v657
    %v719 = vunpack.c.l.b16 %v658
    %v720 = vunpack.c.h.b16 %v658
    %v721 = vunpack.c.l.b16 %v659
    %v722 = vunpack.c.h.b16 %v659
    %v723 = vunpack.c.l.b16 %v660
    %v724 = vunpack.c.h.b16 %v660
    %v725 = vunpack.c.l.b16 %v661
    %v726 = vunpack.c.h.b16 %v661
    %v727 = vunpack.c.l.b16 %v662
    %v728 = vunpack.c.h.b16 %v662
    %v729 = vunpack.c.l.b16 %v663
    %v730 = vunpack.c.h.b16 %v663
    %v731 = vunpack.c.l.b16 %v664
    %v732 = vunpack.c.h.b16 %v664
    %v733 = vunpack.c.l.b16 %v665
    %v734 = vunpack.c.h.b16 %v665
    %v735 = vunpack.c.l.b16 %v666
    %v736 = vunpack.c.h.b16 %v666
    %v737 = vunpack.c.l.b16 %v667
    %v738 = vunpack.c.h.b16 %v667
    %v739 = vunpack.c.l.b16 %v668
    %v740 = vunpack.c.h.b16 %v668
    %v741 = vunpack.c.l.b16 %v669
    %v742 = vunpack.c.h.b16 %v669
    %v743 = vunpack.c.l.b16 %v670
    %v744 = vunpack.c.h.b16 %v670
    %v745 = vunpack.c.l.b16 %v671
    %v746 = vunpack.c.h.b16 %v671
    %v747 = vpack.c.b16 %v697, %v697
    %v748 = vpack.c.b16 %v698, %v698
    %v749 = vpack.c.b16 %v699, %v699
    %v750 = vpack.c.b16 %v700, %v700
    %v751 = vpack.c.b16 %v701, %v701
    %v752 = vpack.c.b16 %v702, %v702
    %v753 = vpack.c.b16 %v703, %v703
    %v754 = vpack.c.b16 %v704, %v704
    %v755 = vpack.c.b16 %v705, %v705
    %v756 = vpack.c.b16 %v706, %v706
    %v757 = vpack.c.b16 %v707, %v707
    %v758 = vpack.c.b16 %v708, %v708
    %v759 = vpack.c.b16 %v709, %v709
    %v760 = vpack.c.b16 %v710, %v710
    %v761 = vpack.c.b16 %v711, %v711
    %v762 = vpack.c.b16 %v712, %v712
    %v763 = vpack.c.b16 %v713, %v713
    %v764 = vpack.c.b16 %v714, %v714
    %v765 = vpack.c.b16 %v715, %v715
    %v766 = vpack.c.b16 %v716, %v716
    %v767 = vpack.c.b16 %v717, %v717
    %v768 = vpack.c.b16 %v718, %v718
    %v769 = vpack.c.b16 %v719, %v719
    %v770 = vpack.c.b16 %v720, %v720
    %v771 = vpack.c.b16 %v721, %v721
    %v772 = vpack.c.b16 %v722, %v722
    %v773 = vpack.c.b16 %v723, %v723
    %v774 = vpack.c.b16 %v724, %v724
    %v775 = vpack.c.b16 %v725, %v725
    %v776 = vpack.c.b16 %v726, %v726
    %v777 = vpack.c.b16 %v727, %v727
    %v778 = vpack.c.b16 %v728, %v728
    %v779 = vpack.c.b16 %v729, %v729
    %v780 = vpack.c.b16 %v730, %v730
    %v781 = vpack.c.b16 %v731, %v731
    %v782 = vpack.c.b16 %v732, %v732
    %v783 = vpack.c.b16 %v733, %v733
    %v784 = vpack.c.b16 %v734, %v734
    %v785 = vpack.c.b16 %v735, %v735
    %v786 = vpack.c.b16 %v736, %v736
    %v787 = vpack.c.b16 %v737, %v737
    %v788 = vpack.c.b16 %v738, %v738
    %v789 = vpack.c.b16 %v739, %v739
    %v790 = vpack.c.b16 %v740, %v740
    %v791 = vpack.c.b16 %v741, %v741
    %v792 = vpack.c.b16 %v742, %v742
    %v793 = vpack.c.b16 %v743, %v743
    %v794 = vpack.c.b16 %v744, %v744
    %v795 = vpack.c.b16 %v745, %v745
    %v796 = vpack.c.b16 %v746, %v746
    %847 = vst [vmem:[#allocation7] sm:$0xf] %v747
    %848 = vst [vmem:[#allocation7 + $0x4] sm:$0xf] %v748
    %849 = vst [vmem:[#allocation7 + $0x8] sm:$0xf] %v749
    %850 = vst [vmem:[#allocation7 + $0xc] sm:$0xf] %v750
    %851 = vst [vmem:[#allocation7 + $0x10] sm:$0xf] %v751
    %852 = vst [vmem:[#allocation7 + $0x14] sm:$0xf] %v752
    %853 = vst [vmem:[#allocation7 + $0x18] sm:$0xf] %v753
    %854 = vst [vmem:[#allocation7 + $0x1c] sm:$0xf] %v754
    %855 = vst [vmem:[#allocation7 + $0x20] sm:$0xf] %v755
    %856 = vst [vmem:[#allocation7 + $0x24] sm:$0xf] %v756
    %857 = vst [vmem:[#allocation7 + $0x28] sm:$0xf] %v757
    %858 = vst [vmem:[#allocation7 + $0x2c] sm:$0xf] %v758
    %859 = vst [vmem:[#allocation7 + $0x30] sm:$0xf] %v759
    %860 = vst [vmem:[#allocation7 + $0x34] sm:$0xf] %v760
    %861 = vst [vmem:[#allocation7 + $0x38] sm:$0xf] %v761
    %862 = vst [vmem:[#allocation7 + $0x3c] sm:$0xf] %v762
    %863 = vst [vmem:[#allocation7 + $0x40] sm:$0xf] %v763
    %864 = vst [vmem:[#allocation7 + $0x44] sm:$0xf] %v764
    %865 = vst [vmem:[#allocation7 + $0x48] sm:$0xf] %v765
    %866 = vst [vmem:[#allocation7 + $0x4c] sm:$0xf] %v766
    %867 = vst [vmem:[#allocation7 + $0x50] sm:$0xf] %v767
    %868 = vst [vmem:[#allocation7 + $0x54] sm:$0xf] %v768
    %869 = vst [vmem:[#allocation7 + $0x58] sm:$0xf] %v769
    %870 = vst [vmem:[#allocation7 + $0x5c] sm:$0xf] %v770
    %871 = vst [vmem:[#allocation7 + $0x60] sm:$0xf] %v771
    %872 = vst [vmem:[#allocation7 + $0x64] sm:$0xf] %v772
    %873 = vst [vmem:[#allocation7 + $0x68] sm:$0xf] %v773
    %874 = vst [vmem:[#allocation7 + $0x6c] sm:$0xf] %v774
    %875 = vst [vmem:[#allocation7 + $0x70] sm:$0xf] %v775
    %876 = vst [vmem:[#allocation7 + $0x74] sm:$0xf] %v776
    %877 = vst [vmem:[#allocation7 + $0x78] sm:$0xf] %v777
    %878 = vst [vmem:[#allocation7 + $0x7c] sm:$0xf] %v778
    %879 = vst [vmem:[#allocation7 + $0x80] sm:$0xf] %v779
    %880 = vst [vmem:[#allocation7 + $0x84] sm:$0xf] %v780
    %881 = vst [vmem:[#allocation7 + $0x88] sm:$0xf] %v781
    %882 = vst [vmem:[#allocation7 + $0x8c] sm:$0xf] %v782
    %883 = vst [vmem:[#allocation7 + $0x90] sm:$0xf] %v783
    %884 = vst [vmem:[#allocation7 + $0x94] sm:$0xf] %v784
    %885 = vst [vmem:[#allocation7 + $0x98] sm:$0xf] %v785
    %886 = vst [vmem:[#allocation7 + $0x9c] sm:$0xf] %v786
    %887 = vst [vmem:[#allocation7 + $0xa0] sm:$0xf] %v787
    %888 = vst [vmem:[#allocation7 + $0xa4] sm:$0xf] %v788
    %889 = vst [vmem:[#allocation7 + $0xa8] sm:$0xf] %v789
    %890 = vst [vmem:[#allocation7 + $0xac] sm:$0xf] %v790
    %891 = vst [vmem:[#allocation7 + $0xb0] sm:$0xf] %v791
    %892 = vst [vmem:[#allocation7 + $0xb4] sm:$0xf] %v792
    %893 = vst [vmem:[#allocation7 + $0xb8] sm:$0xf] %v793
    %894 = vst [vmem:[#allocation7 + $0xbc] sm:$0xf] %v794
    %895 = vst [vmem:[#allocation7 + $0xc0] sm:$0xf] %v795
    %896 = vst [vmem:[#allocation7 + $0xc4] sm:$0xf] %v796
    // Predicated region
    $region22: #{tpu_custom_call.1} parent=1 // pred_check
      _
    $region23: #{tpu_custom_call.1} parent=1 // pred_check_branch
      %898 = sbr.rel (0) target = $region25
    $region24: #{tpu_custom_call.1} parent=1 // pred_region
      %s900 = ssub.s32 3200, 3200
      %901 = vsyncadd [#allocation4], %s900
      %s902 = sshll.u32 [#allocation7], 4
      %s903 = int_to_ptr.vmem [resolvable:$true] %s902
      %908 = dma.vmem_to_hbm [thread:$0]  %s903, 3200, %s3, [#allocation4], 64, 64, 4
    $region25: #{tpu_custom_call.1} parent=1 // pred_fallthru
      _
    // Predicated region
    $region26: #{tpu_custom_call.1} parent=1 // pred_check
      _
    $region27: #{tpu_custom_call.1} parent=1 // pred_check_branch
      %910 = sbr.rel (0) target = $region29
    $region28: #{tpu_custom_call.1} parent=1 // pred_region
      %911 = dma.done [#allocation4], 3200
    $region29: #{tpu_custom_call.1} parent=1 // pred_fallthru
      _
    %912 = vsyncpa [#allocation3], 1
    %913 = vsyncpa [#allocation6], 1
    %914 = vsyncpa [#allocation4], 1

</llo_original>
